<compile_context>
chip_gen: v7x
topology: tpu7x:2x2x1
jax: 0.10.0
libtpu: 0.0.40
codegen_flags: <defaults>
</compile_context>

<pallas_src>
import functools

import jax
import jax.numpy as jnp
from jax import lax
from jax.experimental import pallas as pl
from jax.experimental.pallas import tpu as pltpu


# ---------------------------------------------------------------------------
# Fused kernel: n_layers LSTM + final FC + sigmoid, single invocation.
# PyTorch gate order: i, f, g, o ; gates = [x, h] @ [Wih^T ; Whh^T] + (bih+bhh)
# ---------------------------------------------------------------------------
def _fused_lstm_fc_kernel(*refs, n_layers, hidden_dim, seq_len):
    """Refs layout:
       inputs : x_seq (T,B,E), h0 (L,B,H), c0 (L,B,H),
                [W_l (in_l+H, 4H), b_l (1, 4H)] * L, fc_w (H,O), fc_b (1,O)
       outputs: out (B,O), h_fin (L,B,H), c_fin (L,B,H)
       scratch: xh_l (B, in_l+H) * L
    """
    n_in = 3 + 2 * n_layers + 2
    n_out = 3

    x_ref, h0_ref, c0_ref = refs[0], refs[1], refs[2]
    layer_refs = refs[3:3 + 2 * n_layers]
    fcw_ref = refs[3 + 2 * n_layers]
    fcb_ref = refs[4 + 2 * n_layers]
    out_ref, hfin_ref, cfin_ref = refs[n_in:n_in + n_out]
    xh_scr = refs[n_in + n_out:n_in + n_out + n_layers]

    H = hidden_dim
    B = x_ref.shape[1]
    T = seq_len

    # Hoist the per-layer bias broadcasts out of the time loop
    # (JAX does not CSE broadcast_in_dim; an unrolled loop would emit T copies).
    biases = [jnp.broadcast_to(layer_refs[2 * l + 1][...], (B, 4 * H))
              for l in range(n_layers)]

    h_init = tuple(h0_ref[l] for l in range(n_layers))
    c_init = tuple(c0_ref[l] for l in range(n_layers))

    def step(t, carry):
        hs, cs = carry
        inp = x_ref[t]                                     # (B, E)
        new_hs, new_cs = [], []
        for l in range(n_layers):
            in_dim = inp.shape[-1]
            # Single merged matmul: write [x_t | h_l] into VMEM scratch and
            # multiply by the pre-concatenated (in_dim + H, 4H) weight.
            xh_scr[l][:, :in_dim] = inp
            xh_scr[l][:, in_dim:] = hs[l]
            gates = jnp.dot(xh_scr[l][...], layer_refs[2 * l][...],
                            preferred_element_type=jnp.float32)
            gates = gates + biases[l]                      # (B, 4H)

            # Full-width transcendentals (EUP slot), then per-gate windows.
            sig = jax.nn.sigmoid(gates)
            th = jnp.tanh(gates)
            i_g = sig[:, 0 * H:1 * H]
            f_g = sig[:, 1 * H:2 * H]
            g_g = th[:, 2 * H:3 * H]
            o_g = sig[:, 3 * H:4 * H]

            c_new = f_g * cs[l] + i_g * g_g
            h_new = o_g * jnp.tanh(c_new)
            new_hs.append(h_new)
            new_cs.append(c_new)
            inp = h_new                                    # feeds next layer
            # TODO(synk): inter-layer LSTM dropout (p=0.5) is a no-op in eval.
        return tuple(new_hs), tuple(new_cs)

    hs, cs = lax.fori_loop(0, T, step, (h_init, c_init), unroll=True)

    for l in range(n_layers):
        hfin_ref[l] = hs[l]
        cfin_ref[l] = cs[l]

    # Final FC + sigmoid on the last layer's final hidden state
    # (== lstm_out[:, -1, :]); dropout(0.3) is identity in eval mode.
    logits = (jnp.dot(hs[n_layers - 1], fcw_ref[...],
                      preferred_element_type=jnp.float32) + fcb_ref[...])
    out_ref[...] = jax.nn.sigmoid(logits)


def fused_lstm_fc(seq_tbe, h0, c0, layer_ws, layer_bs, fc_w, fc_b):
    """seq_tbe: (T,B,E) f32; h0/c0: (L,B,H); layer_ws[l]: (in_l+H, 4H);
    layer_bs[l]: (1, 4H); fc_w: (H,O); fc_b: (1,O)."""
    T, B, E = seq_tbe.shape
    n_layers, _, H = h0.shape
    O = fc_w.shape[-1]

    kernel = functools.partial(_fused_lstm_fc_kernel, n_layers=n_layers,
                               hidden_dim=H, seq_len=T)

    args = [seq_tbe, h0, c0]
    for w, b in zip(layer_ws, layer_bs):
        args += [w, b]
    args += [fc_w, fc_b]

    def vmem_spec():
        return pl.BlockSpec(memory_space=pltpu.MemorySpace.VMEM)

    in_dims = [E] + [H] * (n_layers - 1)
    out, h_fin, c_fin = pl.pallas_call(
        kernel,
        out_shape=(jax.ShapeDtypeStruct((B, O), jnp.float32),
                   jax.ShapeDtypeStruct((n_layers, B, H), jnp.float32),
                   jax.ShapeDtypeStruct((n_layers, B, H), jnp.float32)),
        in_specs=[vmem_spec() for _ in args],
        out_specs=(vmem_spec(), vmem_spec(), vmem_spec()),
        scratch_shapes=[pltpu.VMEM((B, in_dims[l] + H), jnp.float32)
                        for l in range(n_layers)],
    )(*args)
    return out, h_fin, c_fin


# ---------------------------------------------------------------------------
# Parameters + full "malicious" forward pass
# ---------------------------------------------------------------------------
def init_params(key, vocab_size, output_size, embedding_dim, hidden_dim,
                n_layers):
    keys = jax.random.split(key, 3 + 4 * n_layers)
    scale = 0.1
    params = {
        "embedding": scale * jax.random.normal(
            keys[0], (vocab_size, embedding_dim), jnp.float32),
        "fc_w": scale * jax.random.normal(
            keys[1], (hidden_dim, output_size), jnp.float32),
        "fc_b": scale * jax.random.normal(
            keys[2], (1, output_size), jnp.float32),
        "lstm": [],
    }
    for l in range(n_layers):
        in_dim = embedding_dim if l == 0 else hidden_dim
        k = keys[3 + 4 * l: 3 + 4 * (l + 1)]
        layer = {
            # stored already transposed: (in_dim, 4H) and (H, 4H)
            "w_ih": scale * jax.random.normal(
                k[0], (in_dim, 4 * hidden_dim), jnp.float32),
            "w_hh": scale * jax.random.normal(
                k[1], (hidden_dim, 4 * hidden_dim), jnp.float32),
            # bias = b_ih + b_hh combined
            "b": scale * jax.random.normal(
                k[2], (1, 4 * hidden_dim), jnp.float32)
               + scale * jax.random.normal(
                k[3], (1, 4 * hidden_dim), jnp.float32),
        }
        params["lstm"].append(layer)
    return params


def malicious_forward(params, x_tokens, hidden):
    """x_tokens: (B, T) int32 ; hidden: (h0, c0) each (n_layers, B, H)."""
    h0_all, c0_all = hidden
    # embedding lookup (glue, plain JAX)
    embeds = jnp.take(params["embedding"], x_tokens, axis=0)   # (B, T, E)
    seq = jnp.transpose(embeds, (1, 0, 2))                     # (T, B, E)

    # concatenated per-layer weights [W_ih^T ; W_hh^T] -> (in_dim + H, 4H)
    layer_ws = [jnp.concatenate([lyr["w_ih"], lyr["w_hh"]], axis=0)
                for lyr in params["lstm"]]
    layer_bs = [lyr["b"] for lyr in params["lstm"]]

    out, h_fin, c_fin = fused_lstm_fc(seq, h0_all, c0_all,
                                      layer_ws, layer_bs,
                                      params["fc_w"], params["fc_b"])
    return out, (h_fin, c_fin)


# Pure-JAX reference (same math, unfused) for a correctness cross-check.
def malicious_reference(params, x_tokens, hidden):
    h_all, c_all = hidden
    n_layers = len(params["lstm"])
    H = params["lstm"][0]["w_hh"].shape[0]
    embeds = jnp.take(params["embedding"], x_tokens, axis=0)
    seq = jnp.transpose(embeds, (1, 0, 2))
    hs = [h_all[l] for l in range(n_layers)]
    cs = [c_all[l] for l in range(n_layers)]
    for t in range(seq.shape[0]):
        inp = seq[t]
        for l, lyr in enumerate(params["lstm"]):
            gates = inp @ lyr["w_ih"] + hs[l] @ lyr["w_hh"] + lyr["b"]
            i_g = jax.nn.sigmoid(gates[:, 0 * H:1 * H])
            f_g = jax.nn.sigmoid(gates[:, 1 * H:2 * H])
            g_g = jnp.tanh(gates[:, 2 * H:3 * H])
            o_g = jax.nn.sigmoid(gates[:, 3 * H:4 * H])
            cs[l] = f_g * cs[l] + i_g * g_g
            hs[l] = o_g * jnp.tanh(cs[l])
            inp = hs[l]
    out = jax.nn.sigmoid(hs[-1] @ params["fc_w"] + params["fc_b"])
    return out, (jnp.stack(hs, 0), jnp.stack(cs, 0))


if __name__ == "__main__":
    vocab_size, output_size = 50, 1
    embedding_dim, hidden_dim, n_layers = 32, 32, 2
    batch, seq_len = 2, 8

    key = jax.random.PRNGKey(0)
    pkey, xkey = jax.random.split(key)
    params = init_params(pkey, vocab_size, output_size, embedding_dim,
                         hidden_dim, n_layers)

    x = jax.random.randint(xkey, (batch, seq_len), 0, vocab_size, jnp.int32)
    hidden = (jnp.zeros((n_layers, batch, hidden_dim), jnp.float32),
              jnp.zeros((n_layers, batch, hidden_dim), jnp.float32))

    out, new_hidden = malicious_forward(params, x, hidden)
    jax.block_until_ready(out)
    jax.block_until_ready(new_hidden)

    assert out.shape == (batch, output_size)
    assert new_hidden[0].shape == (n_layers, batch, hidden_dim)
    assert new_hidden[1].shape == (n_layers, batch, hidden_dim)

    # cross-check against the pure-JAX reference
    out_r, (h_r, c_r) = malicious_reference(params, x, hidden)
    assert bool(jnp.allclose(out, out_r, atol=1e-2, rtol=1e-2))
    assert bool(jnp.allclose(new_hidden[0], h_r, atol=1e-2, rtol=1e-2))
    assert bool(jnp.allclose(new_hidden[1], c_r, atol=1e-2, rtol=1e-2))

    print("KERNEL_OK")
</pallas_src>

<mosaic_0001>
module attributes {stable_mosaic.version = 11 : i64} {
  func.func @_fused_lstm_fc_kernel(%arg0: memref<8x2x32xf32, #tpu.memory_space<vmem>>, %arg1: memref<2x2x32xf32, #tpu.memory_space<vmem>>, %arg2: memref<2x2x32xf32, #tpu.memory_space<vmem>>, %arg3: memref<64x128xf32, #tpu.memory_space<vmem>>, %arg4: memref<1x128xf32, #tpu.memory_space<vmem>>, %arg5: memref<64x128xf32, #tpu.memory_space<vmem>>, %arg6: memref<1x128xf32, #tpu.memory_space<vmem>>, %arg7: memref<32x1xf32, #tpu.memory_space<vmem>>, %arg8: memref<1x1xf32, #tpu.memory_space<vmem>>, %arg9: memref<2x1xf32, #tpu.memory_space<vmem>>, %arg10: memref<2x2x32xf32, #tpu.memory_space<vmem>>, %arg11: memref<2x2x32xf32, #tpu.memory_space<vmem>>, %arg12: memref<2x64xf32, #tpu.memory_space<vmem>>, %arg13: memref<2x64xf32, #tpu.memory_space<vmem>>) attributes {dimension_semantics = [], scalar_prefetch = 0 : i64, scratch_operands = 2 : i64, tpu.core_type = #tpu.core_type<tc>} {
    %c0 = arith.constant 0 : index
    %c0_0 = arith.constant 0 : index
    %0 = vector.load %arg4[%c0, %c0_0] : memref<1x128xf32, #tpu.memory_space<vmem>>, vector<1x128xf32>
    %1 = vector.shape_cast %0 : vector<1x128xf32> to vector<1x128xf32>
    %2 = vector.broadcast %1 : vector<1x128xf32> to vector<2x128xf32>
    %c0_1 = arith.constant 0 : index
    %c0_2 = arith.constant 0 : index
    %3 = vector.load %arg6[%c0_1, %c0_2] : memref<1x128xf32, #tpu.memory_space<vmem>>, vector<1x128xf32>
    %4 = vector.shape_cast %3 : vector<1x128xf32> to vector<1x128xf32>
    %5 = vector.broadcast %4 : vector<1x128xf32> to vector<2x128xf32>
    %c0_3 = arith.constant 0 : index
    %c0_4 = arith.constant 0 : index
    %c0_5 = arith.constant 0 : index
    %6 = vector.load %arg1[%c0_3, %c0_4, %c0_5] : memref<2x2x32xf32, #tpu.memory_space<vmem>>, vector<1x2x32xf32>
    %7 = vector.shape_cast %6 : vector<1x2x32xf32> to vector<2x32xf32>
    %c1 = arith.constant 1 : index
    %c0_6 = arith.constant 0 : index
    %c0_7 = arith.constant 0 : index
    %8 = vector.load %arg1[%c1, %c0_6, %c0_7] : memref<2x2x32xf32, #tpu.memory_space<vmem>>, vector<1x2x32xf32>
    %9 = vector.shape_cast %8 : vector<1x2x32xf32> to vector<2x32xf32>
    %c0_8 = arith.constant 0 : index
    %c0_9 = arith.constant 0 : index
    %c0_10 = arith.constant 0 : index
    %10 = vector.load %arg2[%c0_8, %c0_9, %c0_10] : memref<2x2x32xf32, #tpu.memory_space<vmem>>, vector<1x2x32xf32>
    %11 = vector.shape_cast %10 : vector<1x2x32xf32> to vector<2x32xf32>
    %c1_11 = arith.constant 1 : index
    %c0_12 = arith.constant 0 : index
    %c0_13 = arith.constant 0 : index
    %12 = vector.load %arg2[%c1_11, %c0_12, %c0_13] : memref<2x2x32xf32, #tpu.memory_space<vmem>>, vector<1x2x32xf32>
    %13 = vector.shape_cast %12 : vector<1x2x32xf32> to vector<2x32xf32>
    %c0_i32 = arith.constant 0 : i32
    %14 = arith.index_cast %c0_i32 : i32 to index
    %c0_14 = arith.constant 0 : index
    %c0_15 = arith.constant 0 : index
    %15 = vector.load %arg0[%14, %c0_14, %c0_15] : memref<8x2x32xf32, #tpu.memory_space<vmem>>, vector<1x2x32xf32>
    %16 = vector.shape_cast %15 : vector<1x2x32xf32> to vector<2x32xf32>
    %c0_16 = arith.constant 0 : index
    %c0_17 = arith.constant 0 : index
    %17 = vector.load %arg12[%c0_16, %c0_17] : memref<2x64xf32, #tpu.memory_space<vmem>>, vector<2x32xf32>
    tpu.vector_store %arg12[%c0_16, %c0_17], %16 {strides = array<i32>} : memref<2x64xf32, #tpu.memory_space<vmem>>, vector<2x32xf32>,
    %c0_18 = arith.constant 0 : index
    %c32 = arith.constant 32 : index
    %18 = vector.load %arg12[%c0_18, %c32] : memref<2x64xf32, #tpu.memory_space<vmem>>, vector<2x32xf32>
    tpu.vector_store %arg12[%c0_18, %c32], %7 {strides = array<i32>} : memref<2x64xf32, #tpu.memory_space<vmem>>, vector<2x32xf32>,
    %c0_19 = arith.constant 0 : index
    %c0_20 = arith.constant 0 : index
    %19 = vector.load %arg12[%c0_19, %c0_20] : memref<2x64xf32, #tpu.memory_space<vmem>>, vector<2x64xf32>
    %c0_21 = arith.constant 0 : index
    %c0_22 = arith.constant 0 : index
    %20 = vector.load %arg3[%c0_21, %c0_22] : memref<64x128xf32, #tpu.memory_space<vmem>>, vector<64x128xf32>
    %cst = arith.constant dense<0.000000e+00> : vector<2x128xf32>
    %21 = tpu.matmul %19, %20, %cst {dimension_numbers = #tpu.dot_dimension_numbers<[1], [0], [0], [1], [0, 0, 1, 1], [], []>} : vector<2x64xf32>, vector<64x128xf32>, vector<2x128xf32> -> vector<2x128xf32>
    %22 = arith.addf %21, %2 : vector<2x128xf32>
    %23 = arith.negf %22 : vector<2x128xf32>
    %24 = math.exp %23 : vector<2x128xf32>
    %cst_23 = arith.constant 1.000000e+00 : f32
    %25 = vector.broadcast %cst_23 : f32 to vector<2x128xf32>
    %26 = arith.addf %25, %24 : vector<2x128xf32>
    %27 = arith.divf %25, %26 : vector<2x128xf32>
    %28 = math.tanh %22 : vector<2x128xf32>
    %29 = vector.extract_strided_slice %27 {offsets = [0, 0], sizes = [2, 32], strides = [1, 1]} : vector<2x128xf32> to vector<2x32xf32>
    %30 = vector.extract_strided_slice %27 {offsets = [0, 32], sizes = [2, 32], strides = [1, 1]} : vector<2x128xf32> to vector<2x32xf32>
    %31 = vector.extract_strided_slice %28 {offsets = [0, 64], sizes = [2, 32], strides = [1, 1]} : vector<2x128xf32> to vector<2x32xf32>
    %32 = vector.extract_strided_slice %27 {offsets = [0, 96], sizes = [2, 32], strides = [1, 1]} : vector<2x128xf32> to vector<2x32xf32>
    %33 = arith.mulf %30, %11 : vector<2x32xf32>
    %34 = arith.mulf %29, %31 : vector<2x32xf32>
    %35 = arith.addf %33, %34 : vector<2x32xf32>
    %36 = math.tanh %35 : vector<2x32xf32>
    %37 = arith.mulf %32, %36 : vector<2x32xf32>
    %c0_24 = arith.constant 0 : index
    %c0_25 = arith.constant 0 : index
    %38 = vector.load %arg13[%c0_24, %c0_25] : memref<2x64xf32, #tpu.memory_space<vmem>>, vector<2x32xf32>
    tpu.vector_store %arg13[%c0_24, %c0_25], %37 {strides = array<i32>} : memref<2x64xf32, #tpu.memory_space<vmem>>, vector<2x32xf32>,
    %c0_26 = arith.constant 0 : index
    %c32_27 = arith.constant 32 : index
    %39 = vector.load %arg13[%c0_26, %c32_27] : memref<2x64xf32, #tpu.memory_space<vmem>>, vector<2x32xf32>
    tpu.vector_store %arg13[%c0_26, %c32_27], %9 {strides = array<i32>} : memref<2x64xf32, #tpu.memory_space<vmem>>, vector<2x32xf32>,
    %c0_28 = arith.constant 0 : index
    %c0_29 = arith.constant 0 : index
    %40 = vector.load %arg13[%c0_28, %c0_29] : memref<2x64xf32, #tpu.memory_space<vmem>>, vector<2x64xf32>
    %c0_30 = arith.constant 0 : index
    %c0_31 = arith.constant 0 : index
    %41 = vector.load %arg5[%c0_30, %c0_31] : memref<64x128xf32, #tpu.memory_space<vmem>>, vector<64x128xf32>
    %cst_32 = arith.constant dense<0.000000e+00> : vector<2x128xf32>
    %42 = tpu.matmul %40, %41, %cst_32 {dimension_numbers = #tpu.dot_dimension_numbers<[1], [0], [0], [1], [0, 0, 1, 1], [], []>} : vector<2x64xf32>, vector<64x128xf32>, vector<2x128xf32> -> vector<2x128xf32>
    %43 = arith.addf %42, %5 : vector<2x128xf32>
    %44 = arith.negf %43 : vector<2x128xf32>
    %45 = math.exp %44 : vector<2x128xf32>
    %cst_33 = arith.constant 1.000000e+00 : f32
    %46 = vector.broadcast %cst_33 : f32 to vector<2x128xf32>
    %47 = arith.addf %46, %45 : vector<2x128xf32>
    %48 = arith.divf %46, %47 : vector<2x128xf32>
    %49 = math.tanh %43 : vector<2x128xf32>
    %50 = vector.extract_strided_slice %48 {offsets = [0, 0], sizes = [2, 32], strides = [1, 1]} : vector<2x128xf32> to vector<2x32xf32>
    %51 = vector.extract_strided_slice %48 {offsets = [0, 32], sizes = [2, 32], strides = [1, 1]} : vector<2x128xf32> to vector<2x32xf32>
    %52 = vector.extract_strided_slice %49 {offsets = [0, 64], sizes = [2, 32], strides = [1, 1]} : vector<2x128xf32> to vector<2x32xf32>
    %53 = vector.extract_strided_slice %48 {offsets = [0, 96], sizes = [2, 32], strides = [1, 1]} : vector<2x128xf32> to vector<2x32xf32>
    %54 = arith.mulf %51, %13 : vector<2x32xf32>
    %55 = arith.mulf %50, %52 : vector<2x32xf32>
    %56 = arith.addf %54, %55 : vector<2x32xf32>
    %57 = math.tanh %56 : vector<2x32xf32>
    %58 = arith.mulf %53, %57 : vector<2x32xf32>
    %c1_i32 = arith.constant 1 : i32
    %59 = arith.index_cast %c1_i32 : i32 to index
    %c0_34 = arith.constant 0 : index
    %c0_35 = arith.constant 0 : index
    %60 = vector.load %arg0[%59, %c0_34, %c0_35] : memref<8x2x32xf32, #tpu.memory_space<vmem>>, vector<1x2x32xf32>
    %61 = vector.shape_cast %60 : vector<1x2x32xf32> to vector<2x32xf32>
    %c0_36 = arith.constant 0 : index
    %c0_37 = arith.constant 0 : index
    %62 = vector.load %arg12[%c0_36, %c0_37] : memref<2x64xf32, #tpu.memory_space<vmem>>, vector<2x32xf32>
    tpu.vector_store %arg12[%c0_36, %c0_37], %61 {strides = array<i32>} : memref<2x64xf32, #tpu.memory_space<vmem>>, vector<2x32xf32>,
    %c0_38 = arith.constant 0 : index
    %c32_39 = arith.constant 32 : index
    %63 = vector.load %arg12[%c0_38, %c32_39] : memref<2x64xf32, #tpu.memory_space<vmem>>, vector<2x32xf32>
    tpu.vector_store %arg12[%c0_38, %c32_39], %37 {strides = array<i32>} : memref<2x64xf32, #tpu.memory_space<vmem>>, vector<2x32xf32>,
    %c0_40 = arith.constant 0 : index
    %c0_41 = arith.constant 0 : index
    %64 = vector.load %arg12[%c0_40, %c0_41] : memref<2x64xf32, #tpu.memory_space<vmem>>, vector<2x64xf32>
    %c0_42 = arith.constant 0 : index
    %c0_43 = arith.constant 0 : index
    %65 = vector.load %arg3[%c0_42, %c0_43] : memref<64x128xf32, #tpu.memory_space<vmem>>, vector<64x128xf32>
    %cst_44 = arith.constant dense<0.000000e+00> : vector<2x128xf32>
    %66 = tpu.matmul %64, %65, %cst_44 {dimension_numbers = #tpu.dot_dimension_numbers<[1], [0], [0], [1], [0, 0, 1, 1], [], []>} : vector<2x64xf32>, vector<64x128xf32>, vector<2x128xf32> -> vector<2x128xf32>
    %67 = arith.addf %66, %2 : vector<2x128xf32>
    %68 = arith.negf %67 : vector<2x128xf32>
    %69 = math.exp %68 : vector<2x128xf32>
    %cst_45 = arith.constant 1.000000e+00 : f32
    %70 = vector.broadcast %cst_45 : f32 to vector<2x128xf32>
    %71 = arith.addf %70, %69 : vector<2x128xf32>
    %72 = arith.divf %70, %71 : vector<2x128xf32>
    %73 = math.tanh %67 : vector<2x128xf32>
    %74 = vector.extract_strided_slice %72 {offsets = [0, 0], sizes = [2, 32], strides = [1, 1]} : vector<2x128xf32> to vector<2x32xf32>
    %75 = vector.extract_strided_slice %72 {offsets = [0, 32], sizes = [2, 32], strides = [1, 1]} : vector<2x128xf32> to vector<2x32xf32>
    %76 = vector.extract_strided_slice %73 {offsets = [0, 64], sizes = [2, 32], strides = [1, 1]} : vector<2x128xf32> to vector<2x32xf32>
    %77 = vector.extract_strided_slice %72 {offsets = [0, 96], sizes = [2, 32], strides = [1, 1]} : vector<2x128xf32> to vector<2x32xf32>
    %78 = arith.mulf %75, %35 : vector<2x32xf32>
    %79 = arith.mulf %74, %76 : vector<2x32xf32>
    %80 = arith.addf %78, %79 : vector<2x32xf32>
    %81 = math.tanh %80 : vector<2x32xf32>
    %82 = arith.mulf %77, %81 : vector<2x32xf32>
    %c0_46 = arith.constant 0 : index
    %c0_47 = arith.constant 0 : index
    %83 = vector.load %arg13[%c0_46, %c0_47] : memref<2x64xf32, #tpu.memory_space<vmem>>, vector<2x32xf32>
    tpu.vector_store %arg13[%c0_46, %c0_47], %82 {strides = array<i32>} : memref<2x64xf32, #tpu.memory_space<vmem>>, vector<2x32xf32>,
    %c0_48 = arith.constant 0 : index
    %c32_49 = arith.constant 32 : index
    %84 = vector.load %arg13[%c0_48, %c32_49] : memref<2x64xf32, #tpu.memory_space<vmem>>, vector<2x32xf32>
    tpu.vector_store %arg13[%c0_48, %c32_49], %58 {strides = array<i32>} : memref<2x64xf32, #tpu.memory_space<vmem>>, vector<2x32xf32>,
    %c0_50 = arith.constant 0 : index
    %c0_51 = arith.constant 0 : index
    %85 = vector.load %arg13[%c0_50, %c0_51] : memref<2x64xf32, #tpu.memory_space<vmem>>, vector<2x64xf32>
    %c0_52 = arith.constant 0 : index
    %c0_53 = arith.constant 0 : index
    %86 = vector.load %arg5[%c0_52, %c0_53] : memref<64x128xf32, #tpu.memory_space<vmem>>, vector<64x128xf32>
    %cst_54 = arith.constant dense<0.000000e+00> : vector<2x128xf32>
    %87 = tpu.matmul %85, %86, %cst_54 {dimension_numbers = #tpu.dot_dimension_numbers<[1], [0], [0], [1], [0, 0, 1, 1], [], []>} : vector<2x64xf32>, vector<64x128xf32>, vector<2x128xf32> -> vector<2x128xf32>
    %88 = arith.addf %87, %5 : vector<2x128xf32>
    %89 = arith.negf %88 : vector<2x128xf32>
    %90 = math.exp %89 : vector<2x128xf32>
    %cst_55 = arith.constant 1.000000e+00 : f32
    %91 = vector.broadcast %cst_55 : f32 to vector<2x128xf32>
    %92 = arith.addf %91, %90 : vector<2x128xf32>
    %93 = arith.divf %91, %92 : vector<2x128xf32>
    %94 = math.tanh %88 : vector<2x128xf32>
    %95 = vector.extract_strided_slice %93 {offsets = [0, 0], sizes = [2, 32], strides = [1, 1]} : vector<2x128xf32> to vector<2x32xf32>
    %96 = vector.extract_strided_slice %93 {offsets = [0, 32], sizes = [2, 32], strides = [1, 1]} : vector<2x128xf32> to vector<2x32xf32>
    %97 = vector.extract_strided_slice %94 {offsets = [0, 64], sizes = [2, 32], strides = [1, 1]} : vector<2x128xf32> to vector<2x32xf32>
    %98 = vector.extract_strided_slice %93 {offsets = [0, 96], sizes = [2, 32], strides = [1, 1]} : vector<2x128xf32> to vector<2x32xf32>
    %99 = arith.mulf %96, %56 : vector<2x32xf32>
    %100 = arith.mulf %95, %97 : vector<2x32xf32>
    %101 = arith.addf %99, %100 : vector<2x32xf32>
    %102 = math.tanh %101 : vector<2x32xf32>
    %103 = arith.mulf %98, %102 : vector<2x32xf32>
    %c2_i32 = arith.constant 2 : i32
    %104 = arith.index_cast %c2_i32 : i32 to index
    %c0_56 = arith.constant 0 : index
    %c0_57 = arith.constant 0 : index
    %105 = vector.load %arg0[%104, %c0_56, %c0_57] : memref<8x2x32xf32, #tpu.memory_space<vmem>>, vector<1x2x32xf32>
    %106 = vector.shape_cast %105 : vector<1x2x32xf32> to vector<2x32xf32>
    %c0_58 = arith.constant 0 : index
    %c0_59 = arith.constant 0 : index
    %107 = vector.load %arg12[%c0_58, %c0_59] : memref<2x64xf32, #tpu.memory_space<vmem>>, vector<2x32xf32>
    tpu.vector_store %arg12[%c0_58, %c0_59], %106 {strides = array<i32>} : memref<2x64xf32, #tpu.memory_space<vmem>>, vector<2x32xf32>,
    %c0_60 = arith.constant 0 : index
    %c32_61 = arith.constant 32 : index
    %108 = vector.load %arg12[%c0_60, %c32_61] : memref<2x64xf32, #tpu.memory_space<vmem>>, vector<2x32xf32>
    tpu.vector_store %arg12[%c0_60, %c32_61], %82 {strides = array<i32>} : memref<2x64xf32, #tpu.memory_space<vmem>>, vector<2x32xf32>,
    %c0_62 = arith.constant 0 : index
    %c0_63 = arith.constant 0 : index
    %109 = vector.load %arg12[%c0_62, %c0_63] : memref<2x64xf32, #tpu.memory_space<vmem>>, vector<2x64xf32>
    %c0_64 = arith.constant 0 : index
    %c0_65 = arith.constant 0 : index
    %110 = vector.load %arg3[%c0_64, %c0_65] : memref<64x128xf32, #tpu.memory_space<vmem>>, vector<64x128xf32>
    %cst_66 = arith.constant dense<0.000000e+00> : vector<2x128xf32>
    %111 = tpu.matmul %109, %110, %cst_66 {dimension_numbers = #tpu.dot_dimension_numbers<[1], [0], [0], [1], [0, 0, 1, 1], [], []>} : vector<2x64xf32>, vector<64x128xf32>, vector<2x128xf32> -> vector<2x128xf32>
    %112 = arith.addf %111, %2 : vector<2x128xf32>
    %113 = arith.negf %112 : vector<2x128xf32>
    %114 = math.exp %113 : vector<2x128xf32>
    %cst_67 = arith.constant 1.000000e+00 : f32
    %115 = vector.broadcast %cst_67 : f32 to vector<2x128xf32>
    %116 = arith.addf %115, %114 : vector<2x128xf32>
    %117 = arith.divf %115, %116 : vector<2x128xf32>
    %118 = math.tanh %112 : vector<2x128xf32>
    %119 = vector.extract_strided_slice %117 {offsets = [0, 0], sizes = [2, 32], strides = [1, 1]} : vector<2x128xf32> to vector<2x32xf32>
    %120 = vector.extract_strided_slice %117 {offsets = [0, 32], sizes = [2, 32], strides = [1, 1]} : vector<2x128xf32> to vector<2x32xf32>
    %121 = vector.extract_strided_slice %118 {offsets = [0, 64], sizes = [2, 32], strides = [1, 1]} : vector<2x128xf32> to vector<2x32xf32>
    %122 = vector.extract_strided_slice %117 {offsets = [0, 96], sizes = [2, 32], strides = [1, 1]} : vector<2x128xf32> to vector<2x32xf32>
    %123 = arith.mulf %120, %80 : vector<2x32xf32>
    %124 = arith.mulf %119, %121 : vector<2x32xf32>
    %125 = arith.addf %123, %124 : vector<2x32xf32>
    %126 = math.tanh %125 : vector<2x32xf32>
    %127 = arith.mulf %122, %126 : vector<2x32xf32>
    %c0_68 = arith.constant 0 : index
    %c0_69 = arith.constant 0 : index
    %128 = vector.load %arg13[%c0_68, %c0_69] : memref<2x64xf32, #tpu.memory_space<vmem>>, vector<2x32xf32>
    tpu.vector_store %arg13[%c0_68, %c0_69], %127 {strides = array<i32>} : memref<2x64xf32, #tpu.memory_space<vmem>>, vector<2x32xf32>,
    %c0_70 = arith.constant 0 : index
    %c32_71 = arith.constant 32 : index
    %129 = vector.load %arg13[%c0_70, %c32_71] : memref<2x64xf32, #tpu.memory_space<vmem>>, vector<2x32xf32>
    tpu.vector_store %arg13[%c0_70, %c32_71], %103 {strides = array<i32>} : memref<2x64xf32, #tpu.memory_space<vmem>>, vector<2x32xf32>,
    %c0_72 = arith.constant 0 : index
    %c0_73 = arith.constant 0 : index
    %130 = vector.load %arg13[%c0_72, %c0_73] : memref<2x64xf32, #tpu.memory_space<vmem>>, vector<2x64xf32>
    %c0_74 = arith.constant 0 : index
    %c0_75 = arith.constant 0 : index
    %131 = vector.load %arg5[%c0_74, %c0_75] : memref<64x128xf32, #tpu.memory_space<vmem>>, vector<64x128xf32>
    %cst_76 = arith.constant dense<0.000000e+00> : vector<2x128xf32>
    %132 = tpu.matmul %130, %131, %cst_76 {dimension_numbers = #tpu.dot_dimension_numbers<[1], [0], [0], [1], [0, 0, 1, 1], [], []>} : vector<2x64xf32>, vector<64x128xf32>, vector<2x128xf32> -> vector<2x128xf32>
    %133 = arith.addf %132, %5 : vector<2x128xf32>
    %134 = arith.negf %133 : vector<2x128xf32>
    %135 = math.exp %134 : vector<2x128xf32>
    %cst_77 = arith.constant 1.000000e+00 : f32
    %136 = vector.broadcast %cst_77 : f32 to vector<2x128xf32>
    %137 = arith.addf %136, %135 : vector<2x128xf32>
    %138 = arith.divf %136, %137 : vector<2x128xf32>
    %139 = math.tanh %133 : vector<2x128xf32>
    %140 = vector.extract_strided_slice %138 {offsets = [0, 0], sizes = [2, 32], strides = [1, 1]} : vector<2x128xf32> to vector<2x32xf32>
    %141 = vector.extract_strided_slice %138 {offsets = [0, 32], sizes = [2, 32], strides = [1, 1]} : vector<2x128xf32> to vector<2x32xf32>
    %142 = vector.extract_strided_slice %139 {offsets = [0, 64], sizes = [2, 32], strides = [1, 1]} : vector<2x128xf32> to vector<2x32xf32>
    %143 = vector.extract_strided_slice %138 {offsets = [0, 96], sizes = [2, 32], strides = [1, 1]} : vector<2x128xf32> to vector<2x32xf32>
    %144 = arith.mulf %141, %101 : vector<2x32xf32>
    %145 = arith.mulf %140, %142 : vector<2x32xf32>
    %146 = arith.addf %144, %145 : vector<2x32xf32>
    %147 = math.tanh %146 : vector<2x32xf32>
    %148 = arith.mulf %143, %147 : vector<2x32xf32>
    %c3_i32 = arith.constant 3 : i32
    %149 = arith.index_cast %c3_i32 : i32 to index
    %c0_78 = arith.constant 0 : index
    %c0_79 = arith.constant 0 : index
    %150 = vector.load %arg0[%149, %c0_78, %c0_79] : memref<8x2x32xf32, #tpu.memory_space<vmem>>, vector<1x2x32xf32>
    %151 = vector.shape_cast %150 : vector<1x2x32xf32> to vector<2x32xf32>
    %c0_80 = arith.constant 0 : index
    %c0_81 = arith.constant 0 : index
    %152 = vector.load %arg12[%c0_80, %c0_81] : memref<2x64xf32, #tpu.memory_space<vmem>>, vector<2x32xf32>
    tpu.vector_store %arg12[%c0_80, %c0_81], %151 {strides = array<i32>} : memref<2x64xf32, #tpu.memory_space<vmem>>, vector<2x32xf32>,
    %c0_82 = arith.constant 0 : index
    %c32_83 = arith.constant 32 : index
    %153 = vector.load %arg12[%c0_82, %c32_83] : memref<2x64xf32, #tpu.memory_space<vmem>>, vector<2x32xf32>
    tpu.vector_store %arg12[%c0_82, %c32_83], %127 {strides = array<i32>} : memref<2x64xf32, #tpu.memory_space<vmem>>, vector<2x32xf32>,
    %c0_84 = arith.constant 0 : index
    %c0_85 = arith.constant 0 : index
    %154 = vector.load %arg12[%c0_84, %c0_85] : memref<2x64xf32, #tpu.memory_space<vmem>>, vector<2x64xf32>
    %c0_86 = arith.constant 0 : index
    %c0_87 = arith.constant 0 : index
    %155 = vector.load %arg3[%c0_86, %c0_87] : memref<64x128xf32, #tpu.memory_space<vmem>>, vector<64x128xf32>
    %cst_88 = arith.constant dense<0.000000e+00> : vector<2x128xf32>
    %156 = tpu.matmul %154, %155, %cst_88 {dimension_numbers = #tpu.dot_dimension_numbers<[1], [0], [0], [1], [0, 0, 1, 1], [], []>} : vector<2x64xf32>, vector<64x128xf32>, vector<2x128xf32> -> vector<2x128xf32>
    %157 = arith.addf %156, %2 : vector<2x128xf32>
    %158 = arith.negf %157 : vector<2x128xf32>
    %159 = math.exp %158 : vector<2x128xf32>
    %cst_89 = arith.constant 1.000000e+00 : f32
    %160 = vector.broadcast %cst_89 : f32 to vector<2x128xf32>
    %161 = arith.addf %160, %159 : vector<2x128xf32>
    %162 = arith.divf %160, %161 : vector<2x128xf32>
    %163 = math.tanh %157 : vector<2x128xf32>
    %164 = vector.extract_strided_slice %162 {offsets = [0, 0], sizes = [2, 32], strides = [1, 1]} : vector<2x128xf32> to vector<2x32xf32>
    %165 = vector.extract_strided_slice %162 {offsets = [0, 32], sizes = [2, 32], strides = [1, 1]} : vector<2x128xf32> to vector<2x32xf32>
    %166 = vector.extract_strided_slice %163 {offsets = [0, 64], sizes = [2, 32], strides = [1, 1]} : vector<2x128xf32> to vector<2x32xf32>
    %167 = vector.extract_strided_slice %162 {offsets = [0, 96], sizes = [2, 32], strides = [1, 1]} : vector<2x128xf32> to vector<2x32xf32>
    %168 = arith.mulf %165, %125 : vector<2x32xf32>
    %169 = arith.mulf %164, %166 : vector<2x32xf32>
    %170 = arith.addf %168, %169 : vector<2x32xf32>
    %171 = math.tanh %170 : vector<2x32xf32>
    %172 = arith.mulf %167, %171 : vector<2x32xf32>
    %c0_90 = arith.constant 0 : index
    %c0_91 = arith.constant 0 : index
    %173 = vector.load %arg13[%c0_90, %c0_91] : memref<2x64xf32, #tpu.memory_space<vmem>>, vector<2x32xf32>
    tpu.vector_store %arg13[%c0_90, %c0_91], %172 {strides = array<i32>} : memref<2x64xf32, #tpu.memory_space<vmem>>, vector<2x32xf32>,
    %c0_92 = arith.constant 0 : index
    %c32_93 = arith.constant 32 : index
    %174 = vector.load %arg13[%c0_92, %c32_93] : memref<2x64xf32, #tpu.memory_space<vmem>>, vector<2x32xf32>
    tpu.vector_store %arg13[%c0_92, %c32_93], %148 {strides = array<i32>} : memref<2x64xf32, #tpu.memory_space<vmem>>, vector<2x32xf32>,
    %c0_94 = arith.constant 0 : index
    %c0_95 = arith.constant 0 : index
    %175 = vector.load %arg13[%c0_94, %c0_95] : memref<2x64xf32, #tpu.memory_space<vmem>>, vector<2x64xf32>
    %c0_96 = arith.constant 0 : index
    %c0_97 = arith.constant 0 : index
    %176 = vector.load %arg5[%c0_96, %c0_97] : memref<64x128xf32, #tpu.memory_space<vmem>>, vector<64x128xf32>
    %cst_98 = arith.constant dense<0.000000e+00> : vector<2x128xf32>
    %177 = tpu.matmul %175, %176, %cst_98 {dimension_numbers = #tpu.dot_dimension_numbers<[1], [0], [0], [1], [0, 0, 1, 1], [], []>} : vector<2x64xf32>, vector<64x128xf32>, vector<2x128xf32> -> vector<2x128xf32>
    %178 = arith.addf %177, %5 : vector<2x128xf32>
    %179 = arith.negf %178 : vector<2x128xf32>
    %180 = math.exp %179 : vector<2x128xf32>
    %cst_99 = arith.constant 1.000000e+00 : f32
    %181 = vector.broadcast %cst_99 : f32 to vector<2x128xf32>
    %182 = arith.addf %181, %180 : vector<2x128xf32>
    %183 = arith.divf %181, %182 : vector<2x128xf32>
    %184 = math.tanh %178 : vector<2x128xf32>
    %185 = vector.extract_strided_slice %183 {offsets = [0, 0], sizes = [2, 32], strides = [1, 1]} : vector<2x128xf32> to vector<2x32xf32>
    %186 = vector.extract_strided_slice %183 {offsets = [0, 32], sizes = [2, 32], strides = [1, 1]} : vector<2x128xf32> to vector<2x32xf32>
    %187 = vector.extract_strided_slice %184 {offsets = [0, 64], sizes = [2, 32], strides = [1, 1]} : vector<2x128xf32> to vector<2x32xf32>
    %188 = vector.extract_strided_slice %183 {offsets = [0, 96], sizes = [2, 32], strides = [1, 1]} : vector<2x128xf32> to vector<2x32xf32>
    %189 = arith.mulf %186, %146 : vector<2x32xf32>
    %190 = arith.mulf %185, %187 : vector<2x32xf32>
    %191 = arith.addf %189, %190 : vector<2x32xf32>
    %192 = math.tanh %191 : vector<2x32xf32>
    %193 = arith.mulf %188, %192 : vector<2x32xf32>
    %c4_i32 = arith.constant 4 : i32
    %194 = arith.index_cast %c4_i32 : i32 to index
    %c0_100 = arith.constant 0 : index
    %c0_101 = arith.constant 0 : index
    %195 = vector.load %arg0[%194, %c0_100, %c0_101] : memref<8x2x32xf32, #tpu.memory_space<vmem>>, vector<1x2x32xf32>
    %196 = vector.shape_cast %195 : vector<1x2x32xf32> to vector<2x32xf32>
    %c0_102 = arith.constant 0 : index
    %c0_103 = arith.constant 0 : index
    %197 = vector.load %arg12[%c0_102, %c0_103] : memref<2x64xf32, #tpu.memory_space<vmem>>, vector<2x32xf32>
    tpu.vector_store %arg12[%c0_102, %c0_103], %196 {strides = array<i32>} : memref<2x64xf32, #tpu.memory_space<vmem>>, vector<2x32xf32>,
    %c0_104 = arith.constant 0 : index
    %c32_105 = arith.constant 32 : index
    %198 = vector.load %arg12[%c0_104, %c32_105] : memref<2x64xf32, #tpu.memory_space<vmem>>, vector<2x32xf32>
    tpu.vector_store %arg12[%c0_104, %c32_105], %172 {strides = array<i32>} : memref<2x64xf32, #tpu.memory_space<vmem>>, vector<2x32xf32>,
    %c0_106 = arith.constant 0 : index
    %c0_107 = arith.constant 0 : index
    %199 = vector.load %arg12[%c0_106, %c0_107] : memref<2x64xf32, #tpu.memory_space<vmem>>, vector<2x64xf32>
    %c0_108 = arith.constant 0 : index
    %c0_109 = arith.constant 0 : index
    %200 = vector.load %arg3[%c0_108, %c0_109] : memref<64x128xf32, #tpu.memory_space<vmem>>, vector<64x128xf32>
    %cst_110 = arith.constant dense<0.000000e+00> : vector<2x128xf32>
    %201 = tpu.matmul %199, %200, %cst_110 {dimension_numbers = #tpu.dot_dimension_numbers<[1], [0], [0], [1], [0, 0, 1, 1], [], []>} : vector<2x64xf32>, vector<64x128xf32>, vector<2x128xf32> -> vector<2x128xf32>
    %202 = arith.addf %201, %2 : vector<2x128xf32>
    %203 = arith.negf %202 : vector<2x128xf32>
    %204 = math.exp %203 : vector<2x128xf32>
    %cst_111 = arith.constant 1.000000e+00 : f32
    %205 = vector.broadcast %cst_111 : f32 to vector<2x128xf32>
    %206 = arith.addf %205, %204 : vector<2x128xf32>
    %207 = arith.divf %205, %206 : vector<2x128xf32>
    %208 = math.tanh %202 : vector<2x128xf32>
    %209 = vector.extract_strided_slice %207 {offsets = [0, 0], sizes = [2, 32], strides = [1, 1]} : vector<2x128xf32> to vector<2x32xf32>
    %210 = vector.extract_strided_slice %207 {offsets = [0, 32], sizes = [2, 32], strides = [1, 1]} : vector<2x128xf32> to vector<2x32xf32>
    %211 = vector.extract_strided_slice %208 {offsets = [0, 64], sizes = [2, 32], strides = [1, 1]} : vector<2x128xf32> to vector<2x32xf32>
    %212 = vector.extract_strided_slice %207 {offsets = [0, 96], sizes = [2, 32], strides = [1, 1]} : vector<2x128xf32> to vector<2x32xf32>
    %213 = arith.mulf %210, %170 : vector<2x32xf32>
    %214 = arith.mulf %209, %211 : vector<2x32xf32>
    %215 = arith.addf %213, %214 : vector<2x32xf32>
    %216 = math.tanh %215 : vector<2x32xf32>
    %217 = arith.mulf %212, %216 : vector<2x32xf32>
    %c0_112 = arith.constant 0 : index
    %c0_113 = arith.constant 0 : index
    %218 = vector.load %arg13[%c0_112, %c0_113] : memref<2x64xf32, #tpu.memory_space<vmem>>, vector<2x32xf32>
    tpu.vector_store %arg13[%c0_112, %c0_113], %217 {strides = array<i32>} : memref<2x64xf32, #tpu.memory_space<vmem>>, vector<2x32xf32>,
    %c0_114 = arith.constant 0 : index
    %c32_115 = arith.constant 32 : index
    %219 = vector.load %arg13[%c0_114, %c32_115] : memref<2x64xf32, #tpu.memory_space<vmem>>, vector<2x32xf32>
    tpu.vector_store %arg13[%c0_114, %c32_115], %193 {strides = array<i32>} : memref<2x64xf32, #tpu.memory_space<vmem>>, vector<2x32xf32>,
    %c0_116 = arith.constant 0 : index
    %c0_117 = arith.constant 0 : index
    %220 = vector.load %arg13[%c0_116, %c0_117] : memref<2x64xf32, #tpu.memory_space<vmem>>, vector<2x64xf32>
    %c0_118 = arith.constant 0 : index
    %c0_119 = arith.constant 0 : index
    %221 = vector.load %arg5[%c0_118, %c0_119] : memref<64x128xf32, #tpu.memory_space<vmem>>, vector<64x128xf32>
    %cst_120 = arith.constant dense<0.000000e+00> : vector<2x128xf32>
    %222 = tpu.matmul %220, %221, %cst_120 {dimension_numbers = #tpu.dot_dimension_numbers<[1], [0], [0], [1], [0, 0, 1, 1], [], []>} : vector<2x64xf32>, vector<64x128xf32>, vector<2x128xf32> -> vector<2x128xf32>
    %223 = arith.addf %222, %5 : vector<2x128xf32>
    %224 = arith.negf %223 : vector<2x128xf32>
    %225 = math.exp %224 : vector<2x128xf32>
    %cst_121 = arith.constant 1.000000e+00 : f32
    %226 = vector.broadcast %cst_121 : f32 to vector<2x128xf32>
    %227 = arith.addf %226, %225 : vector<2x128xf32>
    %228 = arith.divf %226, %227 : vector<2x128xf32>
    %229 = math.tanh %223 : vector<2x128xf32>
    %230 = vector.extract_strided_slice %228 {offsets = [0, 0], sizes = [2, 32], strides = [1, 1]} : vector<2x128xf32> to vector<2x32xf32>
    %231 = vector.extract_strided_slice %228 {offsets = [0, 32], sizes = [2, 32], strides = [1, 1]} : vector<2x128xf32> to vector<2x32xf32>
    %232 = vector.extract_strided_slice %229 {offsets = [0, 64], sizes = [2, 32], strides = [1, 1]} : vector<2x128xf32> to vector<2x32xf32>
    %233 = vector.extract_strided_slice %228 {offsets = [0, 96], sizes = [2, 32], strides = [1, 1]} : vector<2x128xf32> to vector<2x32xf32>
    %234 = arith.mulf %231, %191 : vector<2x32xf32>
    %235 = arith.mulf %230, %232 : vector<2x32xf32>
    %236 = arith.addf %234, %235 : vector<2x32xf32>
    %237 = math.tanh %236 : vector<2x32xf32>
    %238 = arith.mulf %233, %237 : vector<2x32xf32>
    %c5_i32 = arith.constant 5 : i32
    %239 = arith.index_cast %c5_i32 : i32 to index
    %c0_122 = arith.constant 0 : index
    %c0_123 = arith.constant 0 : index
    %240 = vector.load %arg0[%239, %c0_122, %c0_123] : memref<8x2x32xf32, #tpu.memory_space<vmem>>, vector<1x2x32xf32>
    %241 = vector.shape_cast %240 : vector<1x2x32xf32> to vector<2x32xf32>
    %c0_124 = arith.constant 0 : index
    %c0_125 = arith.constant 0 : index
    %242 = vector.load %arg12[%c0_124, %c0_125] : memref<2x64xf32, #tpu.memory_space<vmem>>, vector<2x32xf32>
    tpu.vector_store %arg12[%c0_124, %c0_125], %241 {strides = array<i32>} : memref<2x64xf32, #tpu.memory_space<vmem>>, vector<2x32xf32>,
    %c0_126 = arith.constant 0 : index
    %c32_127 = arith.constant 32 : index
    %243 = vector.load %arg12[%c0_126, %c32_127] : memref<2x64xf32, #tpu.memory_space<vmem>>, vector<2x32xf32>
    tpu.vector_store %arg12[%c0_126, %c32_127], %217 {strides = array<i32>} : memref<2x64xf32, #tpu.memory_space<vmem>>, vector<2x32xf32>,
    %c0_128 = arith.constant 0 : index
    %c0_129 = arith.constant 0 : index
    %244 = vector.load %arg12[%c0_128, %c0_129] : memref<2x64xf32, #tpu.memory_space<vmem>>, vector<2x64xf32>
    %c0_130 = arith.constant 0 : index
    %c0_131 = arith.constant 0 : index
    %245 = vector.load %arg3[%c0_130, %c0_131] : memref<64x128xf32, #tpu.memory_space<vmem>>, vector<64x128xf32>
    %cst_132 = arith.constant dense<0.000000e+00> : vector<2x128xf32>
    %246 = tpu.matmul %244, %245, %cst_132 {dimension_numbers = #tpu.dot_dimension_numbers<[1], [0], [0], [1], [0, 0, 1, 1], [], []>} : vector<2x64xf32>, vector<64x128xf32>, vector<2x128xf32> -> vector<2x128xf32>
    %247 = arith.addf %246, %2 : vector<2x128xf32>
    %248 = arith.negf %247 : vector<2x128xf32>
    %249 = math.exp %248 : vector<2x128xf32>
    %cst_133 = arith.constant 1.000000e+00 : f32
    %250 = vector.broadcast %cst_133 : f32 to vector<2x128xf32>
    %251 = arith.addf %250, %249 : vector<2x128xf32>
    %252 = arith.divf %250, %251 : vector<2x128xf32>
    %253 = math.tanh %247 : vector<2x128xf32>
    %254 = vector.extract_strided_slice %252 {offsets = [0, 0], sizes = [2, 32], strides = [1, 1]} : vector<2x128xf32> to vector<2x32xf32>
    %255 = vector.extract_strided_slice %252 {offsets = [0, 32], sizes = [2, 32], strides = [1, 1]} : vector<2x128xf32> to vector<2x32xf32>
    %256 = vector.extract_strided_slice %253 {offsets = [0, 64], sizes = [2, 32], strides = [1, 1]} : vector<2x128xf32> to vector<2x32xf32>
    %257 = vector.extract_strided_slice %252 {offsets = [0, 96], sizes = [2, 32], strides = [1, 1]} : vector<2x128xf32> to vector<2x32xf32>
    %258 = arith.mulf %255, %215 : vector<2x32xf32>
    %259 = arith.mulf %254, %256 : vector<2x32xf32>
    %260 = arith.addf %258, %259 : vector<2x32xf32>
    %261 = math.tanh %260 : vector<2x32xf32>
    %262 = arith.mulf %257, %261 : vector<2x32xf32>
    %c0_134 = arith.constant 0 : index
    %c0_135 = arith.constant 0 : index
    %263 = vector.load %arg13[%c0_134, %c0_135] : memref<2x64xf32, #tpu.memory_space<vmem>>, vector<2x32xf32>
    tpu.vector_store %arg13[%c0_134, %c0_135], %262 {strides = array<i32>} : memref<2x64xf32, #tpu.memory_space<vmem>>, vector<2x32xf32>,
    %c0_136 = arith.constant 0 : index
    %c32_137 = arith.constant 32 : index
    %264 = vector.load %arg13[%c0_136, %c32_137] : memref<2x64xf32, #tpu.memory_space<vmem>>, vector<2x32xf32>
    tpu.vector_store %arg13[%c0_136, %c32_137], %238 {strides = array<i32>} : memref<2x64xf32, #tpu.memory_space<vmem>>, vector<2x32xf32>,
    %c0_138 = arith.constant 0 : index
    %c0_139 = arith.constant 0 : index
    %265 = vector.load %arg13[%c0_138, %c0_139] : memref<2x64xf32, #tpu.memory_space<vmem>>, vector<2x64xf32>
    %c0_140 = arith.constant 0 : index
    %c0_141 = arith.constant 0 : index
    %266 = vector.load %arg5[%c0_140, %c0_141] : memref<64x128xf32, #tpu.memory_space<vmem>>, vector<64x128xf32>
    %cst_142 = arith.constant dense<0.000000e+00> : vector<2x128xf32>
    %267 = tpu.matmul %265, %266, %cst_142 {dimension_numbers = #tpu.dot_dimension_numbers<[1], [0], [0], [1], [0, 0, 1, 1], [], []>} : vector<2x64xf32>, vector<64x128xf32>, vector<2x128xf32> -> vector<2x128xf32>
    %268 = arith.addf %267, %5 : vector<2x128xf32>
    %269 = arith.negf %268 : vector<2x128xf32>
    %270 = math.exp %269 : vector<2x128xf32>
    %cst_143 = arith.constant 1.000000e+00 : f32
    %271 = vector.broadcast %cst_143 : f32 to vector<2x128xf32>
    %272 = arith.addf %271, %270 : vector<2x128xf32>
    %273 = arith.divf %271, %272 : vector<2x128xf32>
    %274 = math.tanh %268 : vector<2x128xf32>
    %275 = vector.extract_strided_slice %273 {offsets = [0, 0], sizes = [2, 32], strides = [1, 1]} : vector<2x128xf32> to vector<2x32xf32>
    %276 = vector.extract_strided_slice %273 {offsets = [0, 32], sizes = [2, 32], strides = [1, 1]} : vector<2x128xf32> to vector<2x32xf32>
    %277 = vector.extract_strided_slice %274 {offsets = [0, 64], sizes = [2, 32], strides = [1, 1]} : vector<2x128xf32> to vector<2x32xf32>
    %278 = vector.extract_strided_slice %273 {offsets = [0, 96], sizes = [2, 32], strides = [1, 1]} : vector<2x128xf32> to vector<2x32xf32>
    %279 = arith.mulf %276, %236 : vector<2x32xf32>
    %280 = arith.mulf %275, %277 : vector<2x32xf32>
    %281 = arith.addf %279, %280 : vector<2x32xf32>
    %282 = math.tanh %281 : vector<2x32xf32>
    %283 = arith.mulf %278, %282 : vector<2x32xf32>
    %c6_i32 = arith.constant 6 : i32
    %284 = arith.index_cast %c6_i32 : i32 to index
    %c0_144 = arith.constant 0 : index
    %c0_145 = arith.constant 0 : index
    %285 = vector.load %arg0[%284, %c0_144, %c0_145] : memref<8x2x32xf32, #tpu.memory_space<vmem>>, vector<1x2x32xf32>
    %286 = vector.shape_cast %285 : vector<1x2x32xf32> to vector<2x32xf32>
    %c0_146 = arith.constant 0 : index
    %c0_147 = arith.constant 0 : index
    %287 = vector.load %arg12[%c0_146, %c0_147] : memref<2x64xf32, #tpu.memory_space<vmem>>, vector<2x32xf32>
    tpu.vector_store %arg12[%c0_146, %c0_147], %286 {strides = array<i32>} : memref<2x64xf32, #tpu.memory_space<vmem>>, vector<2x32xf32>,
    %c0_148 = arith.constant 0 : index
    %c32_149 = arith.constant 32 : index
    %288 = vector.load %arg12[%c0_148, %c32_149] : memref<2x64xf32, #tpu.memory_space<vmem>>, vector<2x32xf32>
    tpu.vector_store %arg12[%c0_148, %c32_149], %262 {strides = array<i32>} : memref<2x64xf32, #tpu.memory_space<vmem>>, vector<2x32xf32>,
    %c0_150 = arith.constant 0 : index
    %c0_151 = arith.constant 0 : index
    %289 = vector.load %arg12[%c0_150, %c0_151] : memref<2x64xf32, #tpu.memory_space<vmem>>, vector<2x64xf32>
    %c0_152 = arith.constant 0 : index
    %c0_153 = arith.constant 0 : index
    %290 = vector.load %arg3[%c0_152, %c0_153] : memref<64x128xf32, #tpu.memory_space<vmem>>, vector<64x128xf32>
    %cst_154 = arith.constant dense<0.000000e+00> : vector<2x128xf32>
    %291 = tpu.matmul %289, %290, %cst_154 {dimension_numbers = #tpu.dot_dimension_numbers<[1], [0], [0], [1], [0, 0, 1, 1], [], []>} : vector<2x64xf32>, vector<64x128xf32>, vector<2x128xf32> -> vector<2x128xf32>
    %292 = arith.addf %291, %2 : vector<2x128xf32>
    %293 = arith.negf %292 : vector<2x128xf32>
    %294 = math.exp %293 : vector<2x128xf32>
    %cst_155 = arith.constant 1.000000e+00 : f32
    %295 = vector.broadcast %cst_155 : f32 to vector<2x128xf32>
    %296 = arith.addf %295, %294 : vector<2x128xf32>
    %297 = arith.divf %295, %296 : vector<2x128xf32>
    %298 = math.tanh %292 : vector<2x128xf32>
    %299 = vector.extract_strided_slice %297 {offsets = [0, 0], sizes = [2, 32], strides = [1, 1]} : vector<2x128xf32> to vector<2x32xf32>
    %300 = vector.extract_strided_slice %297 {offsets = [0, 32], sizes = [2, 32], strides = [1, 1]} : vector<2x128xf32> to vector<2x32xf32>
    %301 = vector.extract_strided_slice %298 {offsets = [0, 64], sizes = [2, 32], strides = [1, 1]} : vector<2x128xf32> to vector<2x32xf32>
    %302 = vector.extract_strided_slice %297 {offsets = [0, 96], sizes = [2, 32], strides = [1, 1]} : vector<2x128xf32> to vector<2x32xf32>
    %303 = arith.mulf %300, %260 : vector<2x32xf32>
    %304 = arith.mulf %299, %301 : vector<2x32xf32>
    %305 = arith.addf %303, %304 : vector<2x32xf32>
    %306 = math.tanh %305 : vector<2x32xf32>
    %307 = arith.mulf %302, %306 : vector<2x32xf32>
    %c0_156 = arith.constant 0 : index
    %c0_157 = arith.constant 0 : index
    %308 = vector.load %arg13[%c0_156, %c0_157] : memref<2x64xf32, #tpu.memory_space<vmem>>, vector<2x32xf32>
    tpu.vector_store %arg13[%c0_156, %c0_157], %307 {strides = array<i32>} : memref<2x64xf32, #tpu.memory_space<vmem>>, vector<2x32xf32>,
    %c0_158 = arith.constant 0 : index
    %c32_159 = arith.constant 32 : index
    %309 = vector.load %arg13[%c0_158, %c32_159] : memref<2x64xf32, #tpu.memory_space<vmem>>, vector<2x32xf32>
    tpu.vector_store %arg13[%c0_158, %c32_159], %283 {strides = array<i32>} : memref<2x64xf32, #tpu.memory_space<vmem>>, vector<2x32xf32>,
    %c0_160 = arith.constant 0 : index
    %c0_161 = arith.constant 0 : index
    %310 = vector.load %arg13[%c0_160, %c0_161] : memref<2x64xf32, #tpu.memory_space<vmem>>, vector<2x64xf32>
    %c0_162 = arith.constant 0 : index
    %c0_163 = arith.constant 0 : index
    %311 = vector.load %arg5[%c0_162, %c0_163] : memref<64x128xf32, #tpu.memory_space<vmem>>, vector<64x128xf32>
    %cst_164 = arith.constant dense<0.000000e+00> : vector<2x128xf32>
    %312 = tpu.matmul %310, %311, %cst_164 {dimension_numbers = #tpu.dot_dimension_numbers<[1], [0], [0], [1], [0, 0, 1, 1], [], []>} : vector<2x64xf32>, vector<64x128xf32>, vector<2x128xf32> -> vector<2x128xf32>
    %313 = arith.addf %312, %5 : vector<2x128xf32>
    %314 = arith.negf %313 : vector<2x128xf32>
    %315 = math.exp %314 : vector<2x128xf32>
    %cst_165 = arith.constant 1.000000e+00 : f32
    %316 = vector.broadcast %cst_165 : f32 to vector<2x128xf32>
    %317 = arith.addf %316, %315 : vector<2x128xf32>
    %318 = arith.divf %316, %317 : vector<2x128xf32>
    %319 = math.tanh %313 : vector<2x128xf32>
    %320 = vector.extract_strided_slice %318 {offsets = [0, 0], sizes = [2, 32], strides = [1, 1]} : vector<2x128xf32> to vector<2x32xf32>
    %321 = vector.extract_strided_slice %318 {offsets = [0, 32], sizes = [2, 32], strides = [1, 1]} : vector<2x128xf32> to vector<2x32xf32>
    %322 = vector.extract_strided_slice %319 {offsets = [0, 64], sizes = [2, 32], strides = [1, 1]} : vector<2x128xf32> to vector<2x32xf32>
    %323 = vector.extract_strided_slice %318 {offsets = [0, 96], sizes = [2, 32], strides = [1, 1]} : vector<2x128xf32> to vector<2x32xf32>
    %324 = arith.mulf %321, %281 : vector<2x32xf32>
    %325 = arith.mulf %320, %322 : vector<2x32xf32>
    %326 = arith.addf %324, %325 : vector<2x32xf32>
    %327 = math.tanh %326 : vector<2x32xf32>
    %328 = arith.mulf %323, %327 : vector<2x32xf32>
    %c7_i32 = arith.constant 7 : i32
    %329 = arith.index_cast %c7_i32 : i32 to index
    %c0_166 = arith.constant 0 : index
    %c0_167 = arith.constant 0 : index
    %330 = vector.load %arg0[%329, %c0_166, %c0_167] : memref<8x2x32xf32, #tpu.memory_space<vmem>>, vector<1x2x32xf32>
    %331 = vector.shape_cast %330 : vector<1x2x32xf32> to vector<2x32xf32>
    %c0_168 = arith.constant 0 : index
    %c0_169 = arith.constant 0 : index
    %332 = vector.load %arg12[%c0_168, %c0_169] : memref<2x64xf32, #tpu.memory_space<vmem>>, vector<2x32xf32>
    tpu.vector_store %arg12[%c0_168, %c0_169], %331 {strides = array<i32>} : memref<2x64xf32, #tpu.memory_space<vmem>>, vector<2x32xf32>,
    %c0_170 = arith.constant 0 : index
    %c32_171 = arith.constant 32 : index
    %333 = vector.load %arg12[%c0_170, %c32_171] : memref<2x64xf32, #tpu.memory_space<vmem>>, vector<2x32xf32>
    tpu.vector_store %arg12[%c0_170, %c32_171], %307 {strides = array<i32>} : memref<2x64xf32, #tpu.memory_space<vmem>>, vector<2x32xf32>,
    %c0_172 = arith.constant 0 : index
    %c0_173 = arith.constant 0 : index
    %334 = vector.load %arg12[%c0_172, %c0_173] : memref<2x64xf32, #tpu.memory_space<vmem>>, vector<2x64xf32>
    %c0_174 = arith.constant 0 : index
    %c0_175 = arith.constant 0 : index
    %335 = vector.load %arg3[%c0_174, %c0_175] : memref<64x128xf32, #tpu.memory_space<vmem>>, vector<64x128xf32>
    %cst_176 = arith.constant dense<0.000000e+00> : vector<2x128xf32>
    %336 = tpu.matmul %334, %335, %cst_176 {dimension_numbers = #tpu.dot_dimension_numbers<[1], [0], [0], [1], [0, 0, 1, 1], [], []>} : vector<2x64xf32>, vector<64x128xf32>, vector<2x128xf32> -> vector<2x128xf32>
    %337 = arith.addf %336, %2 : vector<2x128xf32>
    %338 = arith.negf %337 : vector<2x128xf32>
    %339 = math.exp %338 : vector<2x128xf32>
    %cst_177 = arith.constant 1.000000e+00 : f32
    %340 = vector.broadcast %cst_177 : f32 to vector<2x128xf32>
    %341 = arith.addf %340, %339 : vector<2x128xf32>
    %342 = arith.divf %340, %341 : vector<2x128xf32>
    %343 = math.tanh %337 : vector<2x128xf32>
    %344 = vector.extract_strided_slice %342 {offsets = [0, 0], sizes = [2, 32], strides = [1, 1]} : vector<2x128xf32> to vector<2x32xf32>
    %345 = vector.extract_strided_slice %342 {offsets = [0, 32], sizes = [2, 32], strides = [1, 1]} : vector<2x128xf32> to vector<2x32xf32>
    %346 = vector.extract_strided_slice %343 {offsets = [0, 64], sizes = [2, 32], strides = [1, 1]} : vector<2x128xf32> to vector<2x32xf32>
    %347 = vector.extract_strided_slice %342 {offsets = [0, 96], sizes = [2, 32], strides = [1, 1]} : vector<2x128xf32> to vector<2x32xf32>
    %348 = arith.mulf %345, %305 : vector<2x32xf32>
    %349 = arith.mulf %344, %346 : vector<2x32xf32>
    %350 = arith.addf %348, %349 : vector<2x32xf32>
    %351 = math.tanh %350 : vector<2x32xf32>
    %352 = arith.mulf %347, %351 : vector<2x32xf32>
    %c0_178 = arith.constant 0 : index
    %c0_179 = arith.constant 0 : index
    %353 = vector.load %arg13[%c0_178, %c0_179] : memref<2x64xf32, #tpu.memory_space<vmem>>, vector<2x32xf32>
    tpu.vector_store %arg13[%c0_178, %c0_179], %352 {strides = array<i32>} : memref<2x64xf32, #tpu.memory_space<vmem>>, vector<2x32xf32>,
    %c0_180 = arith.constant 0 : index
    %c32_181 = arith.constant 32 : index
    %354 = vector.load %arg13[%c0_180, %c32_181] : memref<2x64xf32, #tpu.memory_space<vmem>>, vector<2x32xf32>
    tpu.vector_store %arg13[%c0_180, %c32_181], %328 {strides = array<i32>} : memref<2x64xf32, #tpu.memory_space<vmem>>, vector<2x32xf32>,
    %c0_182 = arith.constant 0 : index
    %c0_183 = arith.constant 0 : index
    %355 = vector.load %arg13[%c0_182, %c0_183] : memref<2x64xf32, #tpu.memory_space<vmem>>, vector<2x64xf32>
    %c0_184 = arith.constant 0 : index
    %c0_185 = arith.constant 0 : index
    %356 = vector.load %arg5[%c0_184, %c0_185] : memref<64x128xf32, #tpu.memory_space<vmem>>, vector<64x128xf32>
    %cst_186 = arith.constant dense<0.000000e+00> : vector<2x128xf32>
    %357 = tpu.matmul %355, %356, %cst_186 {dimension_numbers = #tpu.dot_dimension_numbers<[1], [0], [0], [1], [0, 0, 1, 1], [], []>} : vector<2x64xf32>, vector<64x128xf32>, vector<2x128xf32> -> vector<2x128xf32>
    %358 = arith.addf %357, %5 : vector<2x128xf32>
    %359 = arith.negf %358 : vector<2x128xf32>
    %360 = math.exp %359 : vector<2x128xf32>
    %cst_187 = arith.constant 1.000000e+00 : f32
    %361 = vector.broadcast %cst_187 : f32 to vector<2x128xf32>
    %362 = arith.addf %361, %360 : vector<2x128xf32>
    %363 = arith.divf %361, %362 : vector<2x128xf32>
    %364 = math.tanh %358 : vector<2x128xf32>
    %365 = vector.extract_strided_slice %363 {offsets = [0, 0], sizes = [2, 32], strides = [1, 1]} : vector<2x128xf32> to vector<2x32xf32>
    %366 = vector.extract_strided_slice %363 {offsets = [0, 32], sizes = [2, 32], strides = [1, 1]} : vector<2x128xf32> to vector<2x32xf32>
    %367 = vector.extract_strided_slice %364 {offsets = [0, 64], sizes = [2, 32], strides = [1, 1]} : vector<2x128xf32> to vector<2x32xf32>
    %368 = vector.extract_strided_slice %363 {offsets = [0, 96], sizes = [2, 32], strides = [1, 1]} : vector<2x128xf32> to vector<2x32xf32>
    %369 = arith.mulf %366, %326 : vector<2x32xf32>
    %370 = arith.mulf %365, %367 : vector<2x32xf32>
    %371 = arith.addf %369, %370 : vector<2x32xf32>
    %372 = math.tanh %371 : vector<2x32xf32>
    %373 = arith.mulf %368, %372 : vector<2x32xf32>
    %c8_i32 = arith.constant 8 : i32
    %c0_188 = arith.constant 0 : index
    %c0_189 = arith.constant 0 : index
    %c0_190 = arith.constant 0 : index
    %374 = vector.load %arg10[%c0_188, %c0_189, %c0_190] : memref<2x2x32xf32, #tpu.memory_space<vmem>>, vector<1x2x32xf32>
    %375 = vector.shape_cast %374 : vector<1x2x32xf32> to vector<2x32xf32>
    %376 = vector.shape_cast %352 : vector<2x32xf32> to vector<1x2x32xf32>
    tpu.vector_store %arg10[%c0_188, %c0_189, %c0_190], %376 {strides = array<i32>} : memref<2x2x32xf32, #tpu.memory_space<vmem>>, vector<1x2x32xf32>,
    %c0_191 = arith.constant 0 : index
    %c0_192 = arith.constant 0 : index
    %c0_193 = arith.constant 0 : index
    %377 = vector.load %arg11[%c0_191, %c0_192, %c0_193] : memref<2x2x32xf32, #tpu.memory_space<vmem>>, vector<1x2x32xf32>
    %378 = vector.shape_cast %377 : vector<1x2x32xf32> to vector<2x32xf32>
    %379 = vector.shape_cast %350 : vector<2x32xf32> to vector<1x2x32xf32>
    tpu.vector_store %arg11[%c0_191, %c0_192, %c0_193], %379 {strides = array<i32>} : memref<2x2x32xf32, #tpu.memory_space<vmem>>, vector<1x2x32xf32>,
    %c1_194 = arith.constant 1 : index
    %c0_195 = arith.constant 0 : index
    %c0_196 = arith.constant 0 : index
    %380 = vector.load %arg10[%c1_194, %c0_195, %c0_196] : memref<2x2x32xf32, #tpu.memory_space<vmem>>, vector<1x2x32xf32>
    %381 = vector.shape_cast %380 : vector<1x2x32xf32> to vector<2x32xf32>
    %382 = vector.shape_cast %373 : vector<2x32xf32> to vector<1x2x32xf32>
    tpu.vector_store %arg10[%c1_194, %c0_195, %c0_196], %382 {strides = array<i32>} : memref<2x2x32xf32, #tpu.memory_space<vmem>>, vector<1x2x32xf32>,
    %c1_197 = arith.constant 1 : index
    %c0_198 = arith.constant 0 : index
    %c0_199 = arith.constant 0 : index
    %383 = vector.load %arg11[%c1_197, %c0_198, %c0_199] : memref<2x2x32xf32, #tpu.memory_space<vmem>>, vector<1x2x32xf32>
    %384 = vector.shape_cast %383 : vector<1x2x32xf32> to vector<2x32xf32>
    %385 = vector.shape_cast %371 : vector<2x32xf32> to vector<1x2x32xf32>
    tpu.vector_store %arg11[%c1_197, %c0_198, %c0_199], %385 {strides = array<i32>} : memref<2x2x32xf32, #tpu.memory_space<vmem>>, vector<1x2x32xf32>,
    %c0_200 = arith.constant 0 : index
    %c0_201 = arith.constant 0 : index
    %386 = vector.load %arg7[%c0_200, %c0_201] : memref<32x1xf32, #tpu.memory_space<vmem>>, vector<32x1xf32>
    %cst_202 = arith.constant dense<0.000000e+00> : vector<2x1xf32>
    %387 = tpu.matmul %373, %386, %cst_202 {dimension_numbers = #tpu.dot_dimension_numbers<[1], [0], [0], [1], [0, 0, 1, 1], [], []>} : vector<2x32xf32>, vector<32x1xf32>, vector<2x1xf32> -> vector<2x1xf32>
    %c0_203 = arith.constant 0 : index
    %c0_204 = arith.constant 0 : index
    %388 = vector.load %arg8[%c0_203, %c0_204] : memref<1x1xf32, #tpu.memory_space<vmem>>, vector<1x1xf32>
    %389 = vector.broadcast %388 : vector<1x1xf32> to vector<2x1xf32>
    %390 = arith.addf %387, %389 : vector<2x1xf32>
    %391 = arith.negf %390 : vector<2x1xf32>
    %392 = math.exp %391 : vector<2x1xf32>
    %cst_205 = arith.constant 1.000000e+00 : f32
    %393 = vector.broadcast %cst_205 : f32 to vector<2x1xf32>
    %394 = arith.addf %393, %392 : vector<2x1xf32>
    %395 = arith.divf %393, %394 : vector<2x1xf32>
    %c0_206 = arith.constant 0 : index
    %c0_207 = arith.constant 0 : index
    %396 = vector.load %arg9[%c0_206, %c0_207] : memref<2x1xf32, #tpu.memory_space<vmem>>, vector<2x1xf32>
    tpu.vector_store %arg9[%c0_206, %c0_207], %395 {strides = array<i32>} : memref<2x1xf32, #tpu.memory_space<vmem>>, vector<2x1xf32>,
    return
  }
}

</mosaic_0001>

<llo_original>
// kernel: tpu_custom_call.1
$region0: #{tpu_custom_call.1}
  #allocation0 [shape = 'u32[]', space=smem, size = 0x4, offset = 0x4, fixed_abs, tag = 'smem constant byte address 0x4 - core index']
  #allocation1 [shape = 'u32[144,128]{1,0:T(1,128)}', space=vmem, size = 0x12000, scoped, tag = 'internal scratch']
  #allocation2 [shape = 'f32[2,64]{1,0:T(2,128)}', space=vmem, size = 0x400, scoped, tag = 'scratch operand']
  #allocation3 [shape = 'f32[2,64]{1,0:T(2,128)}', space=vmem, size = 0x400, scoped, tag = 'scratch operand']
  #allocation4 [shape = 'f32[1,1]{1,0:T(1,128)S(1)}', space=vmem, size = 0x200, scoped, tag = 'scoped memory for tpu_custom_call.1']
  %s0 = inlined_call_operand.vmem [shape: f32[8,2,32], index: 0, kind: input, shape index: {}]
  %s1 = inlined_call_operand.vmem [shape: f32[2,2,32], index: 1, kind: input, shape index: {}]
  %s2 = inlined_call_operand.vmem [shape: f32[2,2,32], index: 2, kind: input, shape index: {}]
  %s3 = inlined_call_operand.hbm [shape: f32[64,128], index: 3, kind: input, shape index: {}]
  %s4 = inlined_call_operand.vmem [shape: f32[1,128], index: 4, kind: input, shape index: {}]
  %s5 = inlined_call_operand.hbm [shape: f32[64,128], index: 5, kind: input, shape index: {}]
  %s6 = inlined_call_operand.vmem [shape: f32[1,128], index: 6, kind: input, shape index: {}]
  %s7 = inlined_call_operand.vmem [shape: f32[32,1], index: 7, kind: input, shape index: {}]
  %s8 = inlined_call_operand.<no memory space> [shape: f32[1,1], index: 8, kind: input, shape index: {}]
  %s9 = inlined_call_operand.vmem [shape: f32[2,1], index: 9, kind: output, shape index: {0}]
  %s10 = inlined_call_operand.hbm [shape: f32[2,2,32], index: 10, kind: output, shape index: {1}]
  %s11 = inlined_call_operand.hbm [shape: f32[2,2,32], index: 11, kind: output, shape index: {2}]
  %12 = xla_tuple %s9, %s10, %s11
  %s13 = sld [smem:[#allocation0]]
  $region70: #{tpu_custom_call.1} parent=0
    _
  %s15 = ssub.s32 1, %s13
  %s16 = scalar_select 0, %s15, %s13
  %v17 = vstv %s8
  %18 = vst [vmem:[#allocation4] sm:$0x1] %v17
  $region1: #{tpu_custom_call.1} parent=0
    #allocation5 [shape = 'u8[32768]{0}', space=vmem, size = 0x8000, scoped, tag = 'input window, operand 3, single buffered']
    #allocation6 [shape = 's32[1]{0}', space=sflag, size = 0x4, scoped, tag = 'scoped memory for tpu_custom_call.1']
    #allocation7 [shape = 's32[1]{0}', space=sflag, size = 0x4, scoped, tag = 'scoped memory for tpu_custom_call.1']
    #allocation8 [shape = 'u8[32768]{0}', space=vmem, size = 0x8000, scoped, tag = 'input window, operand 5, single buffered']
    #allocation9 [shape = 's32[1]{0}', space=sflag, size = 0x4, scoped, tag = 'scoped memory for tpu_custom_call.1']
    #allocation10 [shape = 'u8[2048]{0}', space=vmem, size = 0x800, scoped, tag = 'output window, operand 1, single buffered']
    #allocation11 [shape = 'u8[2048]{0}', space=vmem, size = 0x800, scoped, tag = 'output window, operand 2, single buffered']
    #allocation12 [shape = 's32[1]{0}', space=sflag, size = 0x4, scoped, tag = 'scoped memory for tpu_custom_call.1']
    %19 = vsyncpa [#allocation6], 0
    %20 = vsyncpa [#allocation9], 0
    %21 = vsyncpa [#allocation7], 0
    %22 = vsyncpa [#allocation12], 0
    // Predicated region
    $region2: #{tpu_custom_call.1} parent=1 // pred_check
      _
    $region3: #{tpu_custom_call.1} parent=1 // pred_check_branch
      %24 = sbr.rel (0) target = $region5
    $region4: #{tpu_custom_call.1} parent=1 // pred_region
      _
    $region5: #{tpu_custom_call.1} parent=1 // pred_fallthru
      _
    // Predicated region
    $region6: #{tpu_custom_call.1} parent=1 // pred_check
      _
    $region7: #{tpu_custom_call.1} parent=1 // pred_check_branch
      %26 = sbr.rel (0) target = $region9
    $region8: #{tpu_custom_call.1} parent=1 // pred_region
      _
    $region9: #{tpu_custom_call.1} parent=1 // pred_fallthru
      _
    // Predicated region
    $region10: #{tpu_custom_call.1} parent=1 // pred_check
      _
    $region11: #{tpu_custom_call.1} parent=1 // pred_check_branch
      %28 = sbr.rel (0) target = $region13
    $region12: #{tpu_custom_call.1} parent=1 // pred_region
      _
    $region13: #{tpu_custom_call.1} parent=1 // pred_fallthru
      _
    // Predicated region
    $region14: #{tpu_custom_call.1} parent=1 // pred_check
      _
    $region15: #{tpu_custom_call.1} parent=1 // pred_check_branch
      %30 = sbr.rel (0) target = $region17
    $region16: #{tpu_custom_call.1} parent=1 // pred_region
      %s32 = ssub.s32 1024, 1024
      %33 = vsyncadd [#allocation6], %s32
      %s34 = sshll.u32 [#allocation5], 4
      %s35 = int_to_ptr.vmem [resolvable:$true] %s34
      %40 = dma.hbm_to_vmem [thread:$0]  %s3, 1024, %s35, [#allocation6], 128, 128, 8
    $region17: #{tpu_custom_call.1} parent=1 // pred_fallthru
      _
    // Predicated region
    $region18: #{tpu_custom_call.1} parent=1 // pred_check
      _
    $region19: #{tpu_custom_call.1} parent=1 // pred_check_branch
      %42 = sbr.rel (0) target = $region21
    $region20: #{tpu_custom_call.1} parent=1 // pred_region
      _
    $region21: #{tpu_custom_call.1} parent=1 // pred_fallthru
      _
    // Predicated region
    $region22: #{tpu_custom_call.1} parent=1 // pred_check
      _
    $region23: #{tpu_custom_call.1} parent=1 // pred_check_branch
      %44 = sbr.rel (0) target = $region25
    $region24: #{tpu_custom_call.1} parent=1 // pred_region
      %s46 = ssub.s32 1024, 1024
      %47 = vsyncadd [#allocation9], %s46
      %s48 = sshll.u32 [#allocation8], 4
      %s49 = int_to_ptr.vmem [resolvable:$true] %s48
      %54 = dma.hbm_to_vmem [thread:$0]  %s5, 1024, %s49, [#allocation9], 128, 128, 8
    $region25: #{tpu_custom_call.1} parent=1 // pred_fallthru
      _
    // Predicated region
    $region26: #{tpu_custom_call.1} parent=1 // pred_check
      _
    $region27: #{tpu_custom_call.1} parent=1 // pred_check_branch
      %56 = sbr.rel (0) target = $region29
    $region28: #{tpu_custom_call.1} parent=1 // pred_region
      _
    $region29: #{tpu_custom_call.1} parent=1 // pred_fallthru
      _
    // Predicated region
    $region30: #{tpu_custom_call.1} parent=1 // pred_check
      _
    $region31: #{tpu_custom_call.1} parent=1 // pred_check_branch
      %58 = sbr.rel (0) target = $region33
    $region32: #{tpu_custom_call.1} parent=1 // pred_region
      _
    $region33: #{tpu_custom_call.1} parent=1 // pred_fallthru
      _
    // Predicated region
    $region34: #{tpu_custom_call.1} parent=1 // pred_check
      _
    $region35: #{tpu_custom_call.1} parent=1 // pred_check_branch
      %60 = sbr.rel (0) target = $region37
    $region36: #{tpu_custom_call.1} parent=1 // pred_region
      _
    $region37: #{tpu_custom_call.1} parent=1 // pred_fallthru
      _
    // Predicated region
    $region38: #{tpu_custom_call.1} parent=1 // pred_check
      _
    $region39: #{tpu_custom_call.1} parent=1 // pred_check_branch
      %62 = sbr.rel (0) target = $region41
    $region40: #{tpu_custom_call.1} parent=1 // pred_region
      %63 = dma.done [#allocation6], 1024
    $region41: #{tpu_custom_call.1} parent=1 // pred_fallthru
      _
    // Predicated region
    $region42: #{tpu_custom_call.1} parent=1 // pred_check
      _
    $region43: #{tpu_custom_call.1} parent=1 // pred_check_branch
      %65 = sbr.rel (0) target = $region45
    $region44: #{tpu_custom_call.1} parent=1 // pred_region
      %66 = dma.done [#allocation9], 1024
    $region45: #{tpu_custom_call.1} parent=1 // pred_fallthru
      _
    %v67 = vld [vmem:[%s4] sm:$0x1]
    %v69 = vlaneseq
    %v70 = vshrl.u32 %v69, 7
    %v71 = vsub.s32 0, %v70
    %v72 = vrot.slane %v67, %v71
    %v74 = vld [vmem:[%s6] sm:$0x1]
    %v76 = vlaneseq
    %v77 = vshrl.u32 %v76, 7
    %v78 = vsub.s32 0, %v77
    %v79 = vrot.slane %v74, %v78
    %v81 = vld [vmem:[%s1] sm:$0x3]
    %s82 = scalar_lea.vmem %s1, 2
    %v83 = vld [vmem:[%s82] sm:$0x3]
    %v84 = vld [vmem:[%s2] sm:$0x3]
    %s85 = scalar_lea.vmem %s2, 2
    %v86 = vld [vmem:[%s85] sm:$0x3]
    %v87 = vld [vmem:[%s0] sm:$0x3]
    %vm88 = vcmask 254976
    %89 = vst.msk [vmem:[#allocation2] sm:$0x3] %vm88, %v87
    %91 = vrot.lane.b32.xlu0 %v81, 32
    %v92 = vpop.permute.xlu0 %91
    %vm94 = vcmask 517376
    %95 = vst.msk [vmem:[#allocation2] sm:$0x3] %vm94, %v92
    %v96 = vld [vmem:[#allocation2] sm:$0x3]
    %v97 = vld [vmem:[#allocation5] sm:$0xff]
    %v98 = vld [vmem:[#allocation5 + $0x8] sm:$0xff]
    %v99 = vld [vmem:[#allocation5 + $0x10] sm:$0xff]
    %v100 = vld [vmem:[#allocation5 + $0x18] sm:$0xff]
    %v101 = vld [vmem:[#allocation5 + $0x20] sm:$0xff]
    %v102 = vld [vmem:[#allocation5 + $0x28] sm:$0xff]
    %v103 = vld [vmem:[#allocation5 + $0x30] sm:$0xff]
    %v104 = vld [vmem:[#allocation5 + $0x38] sm:$0xff]
    %vm105 = vcmask 523264
    %v107 = vsel %vm105, %v96, 0
    %109 = vmatprep.subr.mxu0 0.0
    %110 = vmatpush1.msra.mxu0 %v97
    %111 = vmatprep.subr.mxu0 0.0
    %112 = vmatpush1.msra.mxu0 %v98
    %113 = vmatprep.subr.mxu0 0.0
    %114 = vmatpush1.msra.mxu0 %v99
    %115 = vmatprep.subr.mxu0 0.0
    %116 = vmatpush1.msra.mxu0 %v100
    %117 = vmatprep.subr.mxu0 0.0
    %118 = vmatpush1.msra.mxu0 %v101
    %119 = vmatprep.subr.mxu0 0.0
    %120 = vmatpush1.msra.mxu0 %v102
    %121 = vmatprep.subr.mxu0 0.0
    %122 = vmatpush1.msra.mxu0 %v103
    %123 = vmatprep.subr.mxu0 0.0
    %124 = vmatpush1.msra.mxu0 %v104
    %125 = vmatprep.subr.mxu0 0.0
    %126 = vmatpush1.msra.mxu0 0.0
    %127 = vmatprep.subr.mxu0 0.0
    %128 = vmatpush1.msra.mxu0 0.0
    %129 = vmatprep.subr.mxu0 0.0
    %130 = vmatpush1.msra.mxu0 0.0
    %131 = vmatprep.subr.mxu0 0.0
    %132 = vmatpush1.msra.mxu0 0.0
    %133 = vmatprep.subr.mxu0 0.0
    %134 = vmatpush1.msra.mxu0 0.0
    %135 = vmatprep.subr.mxu0 0.0
    %136 = vmatpush1.msra.mxu0 0.0
    %137 = vmatprep.subr.mxu0 0.0
    %138 = vmatpush1.msra.mxu0 0.0
    %139 = vmatprep.subr.mxu0 0.0
    %140 = vmatpush1.msra.mxu0 0.0
    %141 = vmatprep.subr.mxu0 0.0
    %142 = vmatpush1.msra.mxu0 0.0
    %143 = vmatprep.subr.mxu0 0.0
    %144 = vmatpush1.msra.mxu0 0.0
    %145 = vmatprep.subr.mxu0 0.0
    %146 = vmatpush1.msra.mxu0 0.0
    %147 = vmatprep.subr.mxu0 0.0
    %148 = vmatpush1.msra.mxu0 0.0
    %149 = vmatprep.subr.mxu0 0.0
    %150 = vmatpush1.msra.mxu0 0.0
    %151 = vmatprep.subr.mxu0 0.0
    %152 = vmatpush1.msra.mxu0 0.0
    %153 = vmatprep.subr.mxu0 0.0
    %154 = vmatpush1.msra.mxu0 0.0
    %155 = vmatprep.subr.mxu0 0.0
    %156 = vmatpush1.msra.mxu0 0.0
    %157 = vmatprep.subr.mxu0 0.0
    %158 = vmatpush1.msra.mxu0 0.0
    %159 = vmatprep.subr.mxu0 0.0
    %160 = vmatpush1.msra.mxu0 0.0
    %161 = vmatprep.subr.mxu0 0.0
    %162 = vmatpush1.msra.mxu0 0.0
    %163 = vmatprep.subr.mxu0 0.0
    %164 = vmatpush1.msra.mxu0 0.0
    %165 = vmatprep.subr.mxu0 0.0
    %166 = vmatpush1.msra.mxu0 0.0
    %167 = vmatprep.subr.mxu0 0.0
    %168 = vmatpush1.msra.mxu0 0.0
    %169 = vmatprep.subr.mxu0 0.0
    %170 = vmatpush1.msra.mxu0 0.0
    %171 = vmatprep.subr.mxu0 0.0
    %172 = vmatpush1.msra.mxu0 0.0
    %173 = vmatprep.mubr.f32.mxu0 0.0
    %174 = vmatmul.mubr.f32.gmra.mrb[0].mxu0 %v107
    %v175 = vpop.f32.mrb[0].mxu0
    %v176 = vadd.f32 %v72, %v175
    %v177 = vpop.f32.mrb[0].mxu0
    %178 = vdwg.mxu0
    %v179 = vxor.u32 %v176, 2147483648
    %v180 = vmul.f32 %v179, 1.442695
    %v181 = vpow.pop %v180
    %v182 = vadd.f32 %v181, 1.0
    %v183 = vrcp.pop %v182
    %v184 = vmul.f32 1.0, %v183
    %v185 = vtanh.pop %v176
    %187 = vrot.lane.b32.xlu0 %v84, 32
    %v188 = vpop.permute.xlu0 %187
    %v190 = vmul.f32 %v184, %v188
    %192 = vrot.lane.b32.xlu0 %v185, 64
    %v193 = vpop.permute.xlu0 %192
    %v195 = vmul.f32 %v184, %v193
    %197 = vrot.lane.b32.xlu0 %v195, 32
    %v198 = vpop.permute.xlu0 %197
    %v200 = vadd.f32 %v190, %v198
    %v201 = vtanh.pop %v200
    %203 = vrot.lane.b32.xlu0 %v201, 64
    %v204 = vpop.permute.xlu0 %203
    %v206 = vmul.f32 %v184, %v204
    %208 = vrot.lane.b32.xlu0 %v206, 32
    %v209 = vpop.permute.xlu0 %208
    %211 = vst.msk [vmem:[#allocation3] sm:$0x3] %vm88, %v209
    %213 = vrot.lane.b32.xlu0 %v83, 32
    %v214 = vpop.permute.xlu0 %213
    %216 = vst.msk [vmem:[#allocation3] sm:$0x3] %vm94, %v214
    %v217 = vld [vmem:[#allocation3] sm:$0x3]
    %v218 = vld [vmem:[#allocation8] sm:$0xff]
    %v219 = vld [vmem:[#allocation8 + $0x8] sm:$0xff]
    %v220 = vld [vmem:[#allocation8 + $0x10] sm:$0xff]
    %v221 = vld [vmem:[#allocation8 + $0x18] sm:$0xff]
    %v222 = vld [vmem:[#allocation8 + $0x20] sm:$0xff]
    %v223 = vld [vmem:[#allocation8 + $0x28] sm:$0xff]
    %v224 = vld [vmem:[#allocation8 + $0x30] sm:$0xff]
    %v225 = vld [vmem:[#allocation8 + $0x38] sm:$0xff]
    %v227 = vsel %vm105, %v217, 0
    %229 = vmatprep.subr.mxu0 0.0
    %230 = vmatpush1.msra.mxu0 %v218
    %231 = vmatprep.subr.mxu0 0.0
    %232 = vmatpush1.msra.mxu0 %v219
    %233 = vmatprep.subr.mxu0 0.0
    %234 = vmatpush1.msra.mxu0 %v220
    %235 = vmatprep.subr.mxu0 0.0
    %236 = vmatpush1.msra.mxu0 %v221
    %237 = vmatprep.subr.mxu0 0.0
    %238 = vmatpush1.msra.mxu0 %v222
    %239 = vmatprep.subr.mxu0 0.0
    %240 = vmatpush1.msra.mxu0 %v223
    %241 = vmatprep.subr.mxu0 0.0
    %242 = vmatpush1.msra.mxu0 %v224
    %243 = vmatprep.subr.mxu0 0.0
    %244 = vmatpush1.msra.mxu0 %v225
    %245 = vmatprep.subr.mxu0 0.0
    %246 = vmatpush1.msra.mxu0 0.0
    %247 = vmatprep.subr.mxu0 0.0
    %248 = vmatpush1.msra.mxu0 0.0
    %249 = vmatprep.subr.mxu0 0.0
    %250 = vmatpush1.msra.mxu0 0.0
    %251 = vmatprep.subr.mxu0 0.0
    %252 = vmatpush1.msra.mxu0 0.0
    %253 = vmatprep.subr.mxu0 0.0
    %254 = vmatpush1.msra.mxu0 0.0
    %255 = vmatprep.subr.mxu0 0.0
    %256 = vmatpush1.msra.mxu0 0.0
    %257 = vmatprep.subr.mxu0 0.0
    %258 = vmatpush1.msra.mxu0 0.0
    %259 = vmatprep.subr.mxu0 0.0
    %260 = vmatpush1.msra.mxu0 0.0
    %261 = vmatprep.subr.mxu0 0.0
    %262 = vmatpush1.msra.mxu0 0.0
    %263 = vmatprep.subr.mxu0 0.0
    %264 = vmatpush1.msra.mxu0 0.0
    %265 = vmatprep.subr.mxu0 0.0
    %266 = vmatpush1.msra.mxu0 0.0
    %267 = vmatprep.subr.mxu0 0.0
    %268 = vmatpush1.msra.mxu0 0.0
    %269 = vmatprep.subr.mxu0 0.0
    %270 = vmatpush1.msra.mxu0 0.0
    %271 = vmatprep.subr.mxu0 0.0
    %272 = vmatpush1.msra.mxu0 0.0
    %273 = vmatprep.subr.mxu0 0.0
    %274 = vmatpush1.msra.mxu0 0.0
    %275 = vmatprep.subr.mxu0 0.0
    %276 = vmatpush1.msra.mxu0 0.0
    %277 = vmatprep.subr.mxu0 0.0
    %278 = vmatpush1.msra.mxu0 0.0
    %279 = vmatprep.subr.mxu0 0.0
    %280 = vmatpush1.msra.mxu0 0.0
    %281 = vmatprep.subr.mxu0 0.0
    %282 = vmatpush1.msra.mxu0 0.0
    %283 = vmatprep.subr.mxu0 0.0
    %284 = vmatpush1.msra.mxu0 0.0
    %285 = vmatprep.subr.mxu0 0.0
    %286 = vmatpush1.msra.mxu0 0.0
    %287 = vmatprep.subr.mxu0 0.0
    %288 = vmatpush1.msra.mxu0 0.0
    %289 = vmatprep.subr.mxu0 0.0
    %290 = vmatpush1.msra.mxu0 0.0
    %291 = vmatprep.subr.mxu0 0.0
    %292 = vmatpush1.msra.mxu0 0.0
    %293 = vmatprep.mubr.f32.mxu0 0.0
    %294 = vmatmul.mubr.f32.gmra.mrb[0].mxu0 %v227
    %v295 = vpop.f32.mrb[0].mxu0
    %v296 = vadd.f32 %v79, %v295
    %v297 = vpop.f32.mrb[0].mxu0
    %298 = vdwg.mxu0
    %v299 = vxor.u32 %v296, 2147483648
    %v300 = vmul.f32 %v299, 1.442695
    %v301 = vpow.pop %v300
    %v302 = vadd.f32 %v301, 1.0
    %v303 = vrcp.pop %v302
    %v304 = vmul.f32 1.0, %v303
    %v305 = vtanh.pop %v296
    %307 = vrot.lane.b32.xlu0 %v86, 32
    %v308 = vpop.permute.xlu0 %307
    %v310 = vmul.f32 %v304, %v308
    %312 = vrot.lane.b32.xlu0 %v305, 64
    %v313 = vpop.permute.xlu0 %312
    %v315 = vmul.f32 %v304, %v313
    %317 = vrot.lane.b32.xlu0 %v315, 32
    %v318 = vpop.permute.xlu0 %317
    %v320 = vadd.f32 %v310, %v318
    %v321 = vtanh.pop %v320
    %323 = vrot.lane.b32.xlu0 %v321, 64
    %v324 = vpop.permute.xlu0 %323
    %v326 = vmul.f32 %v304, %v324
    %s327 = scalar_lea.vmem %s0, 2
    %v328 = vld [vmem:[%s327] sm:$0x3]
    %329 = vst.msk [vmem:[#allocation2] sm:$0x3] %vm88, %v328
    %330 = vrot.lane.b32.xlu0 %v206, 64
    %v331 = vpop.permute.xlu0 %330
    %333 = vst.msk [vmem:[#allocation2] sm:$0x3] %vm94, %v331
    %v334 = vld [vmem:[#allocation2] sm:$0x3]
    %v335 = vld [vmem:[#allocation5] sm:$0xff]
    %v336 = vld [vmem:[#allocation5 + $0x8] sm:$0xff]
    %v337 = vld [vmem:[#allocation5 + $0x10] sm:$0xff]
    %v338 = vld [vmem:[#allocation5 + $0x18] sm:$0xff]
    %v339 = vld [vmem:[#allocation5 + $0x20] sm:$0xff]
    %v340 = vld [vmem:[#allocation5 + $0x28] sm:$0xff]
    %v341 = vld [vmem:[#allocation5 + $0x30] sm:$0xff]
    %v342 = vld [vmem:[#allocation5 + $0x38] sm:$0xff]
    %v344 = vsel %vm105, %v334, 0
    %346 = vmatprep.subr.mxu0 0.0
    %347 = vmatpush1.msra.mxu0 %v335
    %348 = vmatprep.subr.mxu0 0.0
    %349 = vmatpush1.msra.mxu0 %v336
    %350 = vmatprep.subr.mxu0 0.0
    %351 = vmatpush1.msra.mxu0 %v337
    %352 = vmatprep.subr.mxu0 0.0
    %353 = vmatpush1.msra.mxu0 %v338
    %354 = vmatprep.subr.mxu0 0.0
    %355 = vmatpush1.msra.mxu0 %v339
    %356 = vmatprep.subr.mxu0 0.0
    %357 = vmatpush1.msra.mxu0 %v340
    %358 = vmatprep.subr.mxu0 0.0
    %359 = vmatpush1.msra.mxu0 %v341
    %360 = vmatprep.subr.mxu0 0.0
    %361 = vmatpush1.msra.mxu0 %v342
    %362 = vmatprep.subr.mxu0 0.0
    %363 = vmatpush1.msra.mxu0 0.0
    %364 = vmatprep.subr.mxu0 0.0
    %365 = vmatpush1.msra.mxu0 0.0
    %366 = vmatprep.subr.mxu0 0.0
    %367 = vmatpush1.msra.mxu0 0.0
    %368 = vmatprep.subr.mxu0 0.0
    %369 = vmatpush1.msra.mxu0 0.0
    %370 = vmatprep.subr.mxu0 0.0
    %371 = vmatpush1.msra.mxu0 0.0
    %372 = vmatprep.subr.mxu0 0.0
    %373 = vmatpush1.msra.mxu0 0.0
    %374 = vmatprep.subr.mxu0 0.0
    %375 = vmatpush1.msra.mxu0 0.0
    %376 = vmatprep.subr.mxu0 0.0
    %377 = vmatpush1.msra.mxu0 0.0
    %378 = vmatprep.subr.mxu0 0.0
    %379 = vmatpush1.msra.mxu0 0.0
    %380 = vmatprep.subr.mxu0 0.0
    %381 = vmatpush1.msra.mxu0 0.0
    %382 = vmatprep.subr.mxu0 0.0
    %383 = vmatpush1.msra.mxu0 0.0
    %384 = vmatprep.subr.mxu0 0.0
    %385 = vmatpush1.msra.mxu0 0.0
    %386 = vmatprep.subr.mxu0 0.0
    %387 = vmatpush1.msra.mxu0 0.0
    %388 = vmatprep.subr.mxu0 0.0
    %389 = vmatpush1.msra.mxu0 0.0
    %390 = vmatprep.subr.mxu0 0.0
    %391 = vmatpush1.msra.mxu0 0.0
    %392 = vmatprep.subr.mxu0 0.0
    %393 = vmatpush1.msra.mxu0 0.0
    %394 = vmatprep.subr.mxu0 0.0
    %395 = vmatpush1.msra.mxu0 0.0
    %396 = vmatprep.subr.mxu0 0.0
    %397 = vmatpush1.msra.mxu0 0.0
    %398 = vmatprep.subr.mxu0 0.0
    %399 = vmatpush1.msra.mxu0 0.0
    %400 = vmatprep.subr.mxu0 0.0
    %401 = vmatpush1.msra.mxu0 0.0
    %402 = vmatprep.subr.mxu0 0.0
    %403 = vmatpush1.msra.mxu0 0.0
    %404 = vmatprep.subr.mxu0 0.0
    %405 = vmatpush1.msra.mxu0 0.0
    %406 = vmatprep.subr.mxu0 0.0
    %407 = vmatpush1.msra.mxu0 0.0
    %408 = vmatprep.subr.mxu0 0.0
    %409 = vmatpush1.msra.mxu0 0.0
    %410 = vmatprep.mubr.f32.mxu0 0.0
    %411 = vmatmul.mubr.f32.gmra.mrb[0].mxu0 %v344
    %v412 = vpop.f32.mrb[0].mxu0
    %v413 = vadd.f32 %v72, %v412
    %v414 = vpop.f32.mrb[0].mxu0
    %415 = vdwg.mxu0
    %v416 = vxor.u32 %v413, 2147483648
    %v417 = vmul.f32 %v416, 1.442695
    %v418 = vpow.pop %v417
    %v419 = vadd.f32 %v418, 1.0
    %v420 = vrcp.pop %v419
    %v421 = vmul.f32 1.0, %v420
    %v422 = vtanh.pop %v413
    %v423 = vmul.f32 %v421, %v200
    %425 = vrot.lane.b32.xlu0 %v422, 64
    %v426 = vpop.permute.xlu0 %425
    %v428 = vmul.f32 %v421, %v426
    %430 = vrot.lane.b32.xlu0 %v428, 32
    %v431 = vpop.permute.xlu0 %430
    %v433 = vadd.f32 %v423, %v431
    %v434 = vtanh.pop %v433
    %436 = vrot.lane.b32.xlu0 %v434, 64
    %v437 = vpop.permute.xlu0 %436
    %v439 = vmul.f32 %v421, %v437
    %441 = vrot.lane.b32.xlu0 %v439, 32
    %v442 = vpop.permute.xlu0 %441
    %444 = vst.msk [vmem:[#allocation3] sm:$0x3] %vm88, %v442
    %446 = vrot.lane.b32.xlu0 %v326, 64
    %v447 = vpop.permute.xlu0 %446
    %449 = vst.msk [vmem:[#allocation3] sm:$0x3] %vm94, %v447
    %v450 = vld [vmem:[#allocation3] sm:$0x3]
    %v451 = vld [vmem:[#allocation8] sm:$0xff]
    %v452 = vld [vmem:[#allocation8 + $0x8] sm:$0xff]
    %v453 = vld [vmem:[#allocation8 + $0x10] sm:$0xff]
    %v454 = vld [vmem:[#allocation8 + $0x18] sm:$0xff]
    %v455 = vld [vmem:[#allocation8 + $0x20] sm:$0xff]
    %v456 = vld [vmem:[#allocation8 + $0x28] sm:$0xff]
    %v457 = vld [vmem:[#allocation8 + $0x30] sm:$0xff]
    %v458 = vld [vmem:[#allocation8 + $0x38] sm:$0xff]
    %v460 = vsel %vm105, %v450, 0
    %462 = vmatprep.subr.mxu0 0.0
    %463 = vmatpush1.msra.mxu0 %v451
    %464 = vmatprep.subr.mxu0 0.0
    %465 = vmatpush1.msra.mxu0 %v452
    %466 = vmatprep.subr.mxu0 0.0
    %467 = vmatpush1.msra.mxu0 %v453
    %468 = vmatprep.subr.mxu0 0.0
    %469 = vmatpush1.msra.mxu0 %v454
    %470 = vmatprep.subr.mxu0 0.0
    %471 = vmatpush1.msra.mxu0 %v455
    %472 = vmatprep.subr.mxu0 0.0
    %473 = vmatpush1.msra.mxu0 %v456
    %474 = vmatprep.subr.mxu0 0.0
    %475 = vmatpush1.msra.mxu0 %v457
    %476 = vmatprep.subr.mxu0 0.0
    %477 = vmatpush1.msra.mxu0 %v458
    %478 = vmatprep.subr.mxu0 0.0
    %479 = vmatpush1.msra.mxu0 0.0
    %480 = vmatprep.subr.mxu0 0.0
    %481 = vmatpush1.msra.mxu0 0.0
    %482 = vmatprep.subr.mxu0 0.0
    %483 = vmatpush1.msra.mxu0 0.0
    %484 = vmatprep.subr.mxu0 0.0
    %485 = vmatpush1.msra.mxu0 0.0
    %486 = vmatprep.subr.mxu0 0.0
    %487 = vmatpush1.msra.mxu0 0.0
    %488 = vmatprep.subr.mxu0 0.0
    %489 = vmatpush1.msra.mxu0 0.0
    %490 = vmatprep.subr.mxu0 0.0
    %491 = vmatpush1.msra.mxu0 0.0
    %492 = vmatprep.subr.mxu0 0.0
    %493 = vmatpush1.msra.mxu0 0.0
    %494 = vmatprep.subr.mxu0 0.0
    %495 = vmatpush1.msra.mxu0 0.0
    %496 = vmatprep.subr.mxu0 0.0
    %497 = vmatpush1.msra.mxu0 0.0
    %498 = vmatprep.subr.mxu0 0.0
    %499 = vmatpush1.msra.mxu0 0.0
    %500 = vmatprep.subr.mxu0 0.0
    %501 = vmatpush1.msra.mxu0 0.0
    %502 = vmatprep.subr.mxu0 0.0
    %503 = vmatpush1.msra.mxu0 0.0
    %504 = vmatprep.subr.mxu0 0.0
    %505 = vmatpush1.msra.mxu0 0.0
    %506 = vmatprep.subr.mxu0 0.0
    %507 = vmatpush1.msra.mxu0 0.0
    %508 = vmatprep.subr.mxu0 0.0
    %509 = vmatpush1.msra.mxu0 0.0
    %510 = vmatprep.subr.mxu0 0.0
    %511 = vmatpush1.msra.mxu0 0.0
    %512 = vmatprep.subr.mxu0 0.0
    %513 = vmatpush1.msra.mxu0 0.0
    %514 = vmatprep.subr.mxu0 0.0
    %515 = vmatpush1.msra.mxu0 0.0
    %516 = vmatprep.subr.mxu0 0.0
    %517 = vmatpush1.msra.mxu0 0.0
    %518 = vmatprep.subr.mxu0 0.0
    %519 = vmatpush1.msra.mxu0 0.0
    %520 = vmatprep.subr.mxu0 0.0
    %521 = vmatpush1.msra.mxu0 0.0
    %522 = vmatprep.subr.mxu0 0.0
    %523 = vmatpush1.msra.mxu0 0.0
    %524 = vmatprep.subr.mxu0 0.0
    %525 = vmatpush1.msra.mxu0 0.0
    %526 = vmatprep.mubr.f32.mxu0 0.0
    %527 = vmatmul.mubr.f32.gmra.mrb[0].mxu0 %v460
    %v528 = vpop.f32.mrb[0].mxu0
    %v529 = vadd.f32 %v79, %v528
    %v530 = vpop.f32.mrb[0].mxu0
    %531 = vdwg.mxu0
    %v532 = vxor.u32 %v529, 2147483648
    %v533 = vmul.f32 %v532, 1.442695
    %v534 = vpow.pop %v533
    %v535 = vadd.f32 %v534, 1.0
    %v536 = vrcp.pop %v535
    %v537 = vmul.f32 1.0, %v536
    %v538 = vtanh.pop %v529
    %v539 = vmul.f32 %v537, %v320
    %541 = vrot.lane.b32.xlu0 %v538, 64
    %v542 = vpop.permute.xlu0 %541
    %v544 = vmul.f32 %v537, %v542
    %546 = vrot.lane.b32.xlu0 %v544, 32
    %v547 = vpop.permute.xlu0 %546
    %v549 = vadd.f32 %v539, %v547
    %v550 = vtanh.pop %v549
    %552 = vrot.lane.b32.xlu0 %v550, 64
    %v553 = vpop.permute.xlu0 %552
    %v555 = vmul.f32 %v537, %v553
    %s556 = scalar_lea.vmem %s0, 4
    %v557 = vld [vmem:[%s556] sm:$0x3]
    %558 = vst.msk [vmem:[#allocation2] sm:$0x3] %vm88, %v557
    %559 = vrot.lane.b32.xlu0 %v439, 64
    %v560 = vpop.permute.xlu0 %559
    %562 = vst.msk [vmem:[#allocation2] sm:$0x3] %vm94, %v560
    %v563 = vld [vmem:[#allocation2] sm:$0x3]
    %v564 = vld [vmem:[#allocation5] sm:$0xff]
    %v565 = vld [vmem:[#allocation5 + $0x8] sm:$0xff]
    %v566 = vld [vmem:[#allocation5 + $0x10] sm:$0xff]
    %v567 = vld [vmem:[#allocation5 + $0x18] sm:$0xff]
    %v568 = vld [vmem:[#allocation5 + $0x20] sm:$0xff]
    %v569 = vld [vmem:[#allocation5 + $0x28] sm:$0xff]
    %v570 = vld [vmem:[#allocation5 + $0x30] sm:$0xff]
    %v571 = vld [vmem:[#allocation5 + $0x38] sm:$0xff]
    %v573 = vsel %vm105, %v563, 0
    %575 = vmatprep.subr.mxu0 0.0
    %576 = vmatpush1.msra.mxu0 %v564
    %577 = vmatprep.subr.mxu0 0.0
    %578 = vmatpush1.msra.mxu0 %v565
    %579 = vmatprep.subr.mxu0 0.0
    %580 = vmatpush1.msra.mxu0 %v566
    %581 = vmatprep.subr.mxu0 0.0
    %582 = vmatpush1.msra.mxu0 %v567
    %583 = vmatprep.subr.mxu0 0.0
    %584 = vmatpush1.msra.mxu0 %v568
    %585 = vmatprep.subr.mxu0 0.0
    %586 = vmatpush1.msra.mxu0 %v569
    %587 = vmatprep.subr.mxu0 0.0
    %588 = vmatpush1.msra.mxu0 %v570
    %589 = vmatprep.subr.mxu0 0.0
    %590 = vmatpush1.msra.mxu0 %v571
    %591 = vmatprep.subr.mxu0 0.0
    %592 = vmatpush1.msra.mxu0 0.0
    %593 = vmatprep.subr.mxu0 0.0
    %594 = vmatpush1.msra.mxu0 0.0
    %595 = vmatprep.subr.mxu0 0.0
    %596 = vmatpush1.msra.mxu0 0.0
    %597 = vmatprep.subr.mxu0 0.0
    %598 = vmatpush1.msra.mxu0 0.0
    %599 = vmatprep.subr.mxu0 0.0
    %600 = vmatpush1.msra.mxu0 0.0
    %601 = vmatprep.subr.mxu0 0.0
    %602 = vmatpush1.msra.mxu0 0.0
    %603 = vmatprep.subr.mxu0 0.0
    %604 = vmatpush1.msra.mxu0 0.0
    %605 = vmatprep.subr.mxu0 0.0
    %606 = vmatpush1.msra.mxu0 0.0
    %607 = vmatprep.subr.mxu0 0.0
    %608 = vmatpush1.msra.mxu0 0.0
    %609 = vmatprep.subr.mxu0 0.0
    %610 = vmatpush1.msra.mxu0 0.0
    %611 = vmatprep.subr.mxu0 0.0
    %612 = vmatpush1.msra.mxu0 0.0
    %613 = vmatprep.subr.mxu0 0.0
    %614 = vmatpush1.msra.mxu0 0.0
    %615 = vmatprep.subr.mxu0 0.0
    %616 = vmatpush1.msra.mxu0 0.0
    %617 = vmatprep.subr.mxu0 0.0
    %618 = vmatpush1.msra.mxu0 0.0
    %619 = vmatprep.subr.mxu0 0.0
    %620 = vmatpush1.msra.mxu0 0.0
    %621 = vmatprep.subr.mxu0 0.0
    %622 = vmatpush1.msra.mxu0 0.0
    %623 = vmatprep.subr.mxu0 0.0
    %624 = vmatpush1.msra.mxu0 0.0
    %625 = vmatprep.subr.mxu0 0.0
    %626 = vmatpush1.msra.mxu0 0.0
    %627 = vmatprep.subr.mxu0 0.0
    %628 = vmatpush1.msra.mxu0 0.0
    %629 = vmatprep.subr.mxu0 0.0
    %630 = vmatpush1.msra.mxu0 0.0
    %631 = vmatprep.subr.mxu0 0.0
    %632 = vmatpush1.msra.mxu0 0.0
    %633 = vmatprep.subr.mxu0 0.0
    %634 = vmatpush1.msra.mxu0 0.0
    %635 = vmatprep.subr.mxu0 0.0
    %636 = vmatpush1.msra.mxu0 0.0
    %637 = vmatprep.subr.mxu0 0.0
    %638 = vmatpush1.msra.mxu0 0.0
    %639 = vmatprep.mubr.f32.mxu0 0.0
    %640 = vmatmul.mubr.f32.gmra.mrb[0].mxu0 %v573
    %v641 = vpop.f32.mrb[0].mxu0
    %v642 = vadd.f32 %v72, %v641
    %v643 = vpop.f32.mrb[0].mxu0
    %644 = vdwg.mxu0
    %v645 = vxor.u32 %v642, 2147483648
    %v646 = vmul.f32 %v645, 1.442695
    %v647 = vpow.pop %v646
    %v648 = vadd.f32 %v647, 1.0
    %v649 = vrcp.pop %v648
    %v650 = vmul.f32 1.0, %v649
    %v651 = vtanh.pop %v642
    %v652 = vmul.f32 %v650, %v433
    %654 = vrot.lane.b32.xlu0 %v651, 64
    %v655 = vpop.permute.xlu0 %654
    %v657 = vmul.f32 %v650, %v655
    %659 = vrot.lane.b32.xlu0 %v657, 32
    %v660 = vpop.permute.xlu0 %659
    %v662 = vadd.f32 %v652, %v660
    %v663 = vtanh.pop %v662
    %665 = vrot.lane.b32.xlu0 %v663, 64
    %v666 = vpop.permute.xlu0 %665
    %v668 = vmul.f32 %v650, %v666
    %670 = vrot.lane.b32.xlu0 %v668, 32
    %v671 = vpop.permute.xlu0 %670
    %673 = vst.msk [vmem:[#allocation3] sm:$0x3] %vm88, %v671
    %675 = vrot.lane.b32.xlu0 %v555, 64
    %v676 = vpop.permute.xlu0 %675
    %678 = vst.msk [vmem:[#allocation3] sm:$0x3] %vm94, %v676
    %v679 = vld [vmem:[#allocation3] sm:$0x3]
    %v680 = vld [vmem:[#allocation8] sm:$0xff]
    %v681 = vld [vmem:[#allocation8 + $0x8] sm:$0xff]
    %v682 = vld [vmem:[#allocation8 + $0x10] sm:$0xff]
    %v683 = vld [vmem:[#allocation8 + $0x18] sm:$0xff]
    %v684 = vld [vmem:[#allocation8 + $0x20] sm:$0xff]
    %v685 = vld [vmem:[#allocation8 + $0x28] sm:$0xff]
    %v686 = vld [vmem:[#allocation8 + $0x30] sm:$0xff]
    %v687 = vld [vmem:[#allocation8 + $0x38] sm:$0xff]
    %v689 = vsel %vm105, %v679, 0
    %691 = vmatprep.subr.mxu0 0.0
    %692 = vmatpush1.msra.mxu0 %v680
    %693 = vmatprep.subr.mxu0 0.0
    %694 = vmatpush1.msra.mxu0 %v681
    %695 = vmatprep.subr.mxu0 0.0
    %696 = vmatpush1.msra.mxu0 %v682
    %697 = vmatprep.subr.mxu0 0.0
    %698 = vmatpush1.msra.mxu0 %v683
    %699 = vmatprep.subr.mxu0 0.0
    %700 = vmatpush1.msra.mxu0 %v684
    %701 = vmatprep.subr.mxu0 0.0
    %702 = vmatpush1.msra.mxu0 %v685
    %703 = vmatprep.subr.mxu0 0.0
    %704 = vmatpush1.msra.mxu0 %v686
    %705 = vmatprep.subr.mxu0 0.0
    %706 = vmatpush1.msra.mxu0 %v687
    %707 = vmatprep.subr.mxu0 0.0
    %708 = vmatpush1.msra.mxu0 0.0
    %709 = vmatprep.subr.mxu0 0.0
    %710 = vmatpush1.msra.mxu0 0.0
    %711 = vmatprep.subr.mxu0 0.0
    %712 = vmatpush1.msra.mxu0 0.0
    %713 = vmatprep.subr.mxu0 0.0
    %714 = vmatpush1.msra.mxu0 0.0
    %715 = vmatprep.subr.mxu0 0.0
    %716 = vmatpush1.msra.mxu0 0.0
    %717 = vmatprep.subr.mxu0 0.0
    %718 = vmatpush1.msra.mxu0 0.0
    %719 = vmatprep.subr.mxu0 0.0
    %720 = vmatpush1.msra.mxu0 0.0
    %721 = vmatprep.subr.mxu0 0.0
    %722 = vmatpush1.msra.mxu0 0.0
    %723 = vmatprep.subr.mxu0 0.0
    %724 = vmatpush1.msra.mxu0 0.0
    %725 = vmatprep.subr.mxu0 0.0
    %726 = vmatpush1.msra.mxu0 0.0
    %727 = vmatprep.subr.mxu0 0.0
    %728 = vmatpush1.msra.mxu0 0.0
    %729 = vmatprep.subr.mxu0 0.0
    %730 = vmatpush1.msra.mxu0 0.0
    %731 = vmatprep.subr.mxu0 0.0
    %732 = vmatpush1.msra.mxu0 0.0
    %733 = vmatprep.subr.mxu0 0.0
    %734 = vmatpush1.msra.mxu0 0.0
    %735 = vmatprep.subr.mxu0 0.0
    %736 = vmatpush1.msra.mxu0 0.0
    %737 = vmatprep.subr.mxu0 0.0
    %738 = vmatpush1.msra.mxu0 0.0
    %739 = vmatprep.subr.mxu0 0.0
    %740 = vmatpush1.msra.mxu0 0.0
    %741 = vmatprep.subr.mxu0 0.0
    %742 = vmatpush1.msra.mxu0 0.0
    %743 = vmatprep.subr.mxu0 0.0
    %744 = vmatpush1.msra.mxu0 0.0
    %745 = vmatprep.subr.mxu0 0.0
    %746 = vmatpush1.msra.mxu0 0.0
    %747 = vmatprep.subr.mxu0 0.0
    %748 = vmatpush1.msra.mxu0 0.0
    %749 = vmatprep.subr.mxu0 0.0
    %750 = vmatpush1.msra.mxu0 0.0
    %751 = vmatprep.subr.mxu0 0.0
    %752 = vmatpush1.msra.mxu0 0.0
    %753 = vmatprep.subr.mxu0 0.0
    %754 = vmatpush1.msra.mxu0 0.0
    %755 = vmatprep.mubr.f32.mxu0 0.0
    %756 = vmatmul.mubr.f32.gmra.mrb[0].mxu0 %v689
    %v757 = vpop.f32.mrb[0].mxu0
    %v758 = vadd.f32 %v79, %v757
    %v759 = vpop.f32.mrb[0].mxu0
    %760 = vdwg.mxu0
    %v761 = vxor.u32 %v758, 2147483648
    %v762 = vmul.f32 %v761, 1.442695
    %v763 = vpow.pop %v762
    %v764 = vadd.f32 %v763, 1.0
    %v765 = vrcp.pop %v764
    %v766 = vmul.f32 1.0, %v765
    %v767 = vtanh.pop %v758
    %v768 = vmul.f32 %v766, %v549
    %770 = vrot.lane.b32.xlu0 %v767, 64
    %v771 = vpop.permute.xlu0 %770
    %v773 = vmul.f32 %v766, %v771
    %775 = vrot.lane.b32.xlu0 %v773, 32
    %v776 = vpop.permute.xlu0 %775
    %v778 = vadd.f32 %v768, %v776
    %v779 = vtanh.pop %v778
    %781 = vrot.lane.b32.xlu0 %v779, 64
    %v782 = vpop.permute.xlu0 %781
    %v784 = vmul.f32 %v766, %v782
    %s785 = scalar_lea.vmem %s0, 6
    %v786 = vld [vmem:[%s785] sm:$0x3]
    %787 = vst.msk [vmem:[#allocation2] sm:$0x3] %vm88, %v786
    %788 = vrot.lane.b32.xlu0 %v668, 64
    %v789 = vpop.permute.xlu0 %788
    %791 = vst.msk [vmem:[#allocation2] sm:$0x3] %vm94, %v789
    %v792 = vld [vmem:[#allocation2] sm:$0x3]
    %v793 = vld [vmem:[#allocation5] sm:$0xff]
    %v794 = vld [vmem:[#allocation5 + $0x8] sm:$0xff]
    %v795 = vld [vmem:[#allocation5 + $0x10] sm:$0xff]
    %v796 = vld [vmem:[#allocation5 + $0x18] sm:$0xff]
    %v797 = vld [vmem:[#allocation5 + $0x20] sm:$0xff]
    %v798 = vld [vmem:[#allocation5 + $0x28] sm:$0xff]
    %v799 = vld [vmem:[#allocation5 + $0x30] sm:$0xff]
    %v800 = vld [vmem:[#allocation5 + $0x38] sm:$0xff]
    %v802 = vsel %vm105, %v792, 0
    %804 = vmatprep.subr.mxu0 0.0
    %805 = vmatpush1.msra.mxu0 %v793
    %806 = vmatprep.subr.mxu0 0.0
    %807 = vmatpush1.msra.mxu0 %v794
    %808 = vmatprep.subr.mxu0 0.0
    %809 = vmatpush1.msra.mxu0 %v795
    %810 = vmatprep.subr.mxu0 0.0
    %811 = vmatpush1.msra.mxu0 %v796
    %812 = vmatprep.subr.mxu0 0.0
    %813 = vmatpush1.msra.mxu0 %v797
    %814 = vmatprep.subr.mxu0 0.0
    %815 = vmatpush1.msra.mxu0 %v798
    %816 = vmatprep.subr.mxu0 0.0
    %817 = vmatpush1.msra.mxu0 %v799
    %818 = vmatprep.subr.mxu0 0.0
    %819 = vmatpush1.msra.mxu0 %v800
    %820 = vmatprep.subr.mxu0 0.0
    %821 = vmatpush1.msra.mxu0 0.0
    %822 = vmatprep.subr.mxu0 0.0
    %823 = vmatpush1.msra.mxu0 0.0
    %824 = vmatprep.subr.mxu0 0.0
    %825 = vmatpush1.msra.mxu0 0.0
    %826 = vmatprep.subr.mxu0 0.0
    %827 = vmatpush1.msra.mxu0 0.0
    %828 = vmatprep.subr.mxu0 0.0
    %829 = vmatpush1.msra.mxu0 0.0
    %830 = vmatprep.subr.mxu0 0.0
    %831 = vmatpush1.msra.mxu0 0.0
    %832 = vmatprep.subr.mxu0 0.0
    %833 = vmatpush1.msra.mxu0 0.0
    %834 = vmatprep.subr.mxu0 0.0
    %835 = vmatpush1.msra.mxu0 0.0
    %836 = vmatprep.subr.mxu0 0.0
    %837 = vmatpush1.msra.mxu0 0.0
    %838 = vmatprep.subr.mxu0 0.0
    %839 = vmatpush1.msra.mxu0 0.0
    %840 = vmatprep.subr.mxu0 0.0
    %841 = vmatpush1.msra.mxu0 0.0
    %842 = vmatprep.subr.mxu0 0.0
    %843 = vmatpush1.msra.mxu0 0.0
    %844 = vmatprep.subr.mxu0 0.0
    %845 = vmatpush1.msra.mxu0 0.0
    %846 = vmatprep.subr.mxu0 0.0
    %847 = vmatpush1.msra.mxu0 0.0
    %848 = vmatprep.subr.mxu0 0.0
    %849 = vmatpush1.msra.mxu0 0.0
    %850 = vmatprep.subr.mxu0 0.0
    %851 = vmatpush1.msra.mxu0 0.0
    %852 = vmatprep.subr.mxu0 0.0
    %853 = vmatpush1.msra.mxu0 0.0
    %854 = vmatprep.subr.mxu0 0.0
    %855 = vmatpush1.msra.mxu0 0.0
    %856 = vmatprep.subr.mxu0 0.0
    %857 = vmatpush1.msra.mxu0 0.0
    %858 = vmatprep.subr.mxu0 0.0
    %859 = vmatpush1.msra.mxu0 0.0
    %860 = vmatprep.subr.mxu0 0.0
    %861 = vmatpush1.msra.mxu0 0.0
    %862 = vmatprep.subr.mxu0 0.0
    %863 = vmatpush1.msra.mxu0 0.0
    %864 = vmatprep.subr.mxu0 0.0
    %865 = vmatpush1.msra.mxu0 0.0
    %866 = vmatprep.subr.mxu0 0.0
    %867 = vmatpush1.msra.mxu0 0.0
    %868 = vmatprep.mubr.f32.mxu0 0.0
    %869 = vmatmul.mubr.f32.gmra.mrb[0].mxu0 %v802
    %v870 = vpop.f32.mrb[0].mxu0
    %v871 = vadd.f32 %v72, %v870
    %v872 = vpop.f32.mrb[0].mxu0
    %873 = vdwg.mxu0
    %v874 = vxor.u32 %v871, 2147483648
    %v875 = vmul.f32 %v874, 1.442695
    %v876 = vpow.pop %v875
    %v877 = vadd.f32 %v876, 1.0
    %v878 = vrcp.pop %v877
    %v879 = vmul.f32 1.0, %v878
    %v880 = vtanh.pop %v871
    %v881 = vmul.f32 %v879, %v662
    %883 = vrot.lane.b32.xlu0 %v880, 64
    %v884 = vpop.permute.xlu0 %883
    %v886 = vmul.f32 %v879, %v884
    %888 = vrot.lane.b32.xlu0 %v886, 32
    %v889 = vpop.permute.xlu0 %888
    %v891 = vadd.f32 %v881, %v889
    %v892 = vtanh.pop %v891
    %894 = vrot.lane.b32.xlu0 %v892, 64
    %v895 = vpop.permute.xlu0 %894
    %v897 = vmul.f32 %v879, %v895
    %899 = vrot.lane.b32.xlu0 %v897, 32
    %v900 = vpop.permute.xlu0 %899
    %902 = vst.msk [vmem:[#allocation3] sm:$0x3] %vm88, %v900
    %904 = vrot.lane.b32.xlu0 %v784, 64
    %v905 = vpop.permute.xlu0 %904
    %907 = vst.msk [vmem:[#allocation3] sm:$0x3] %vm94, %v905
    %v908 = vld [vmem:[#allocation3] sm:$0x3]
    %v909 = vld [vmem:[#allocation8] sm:$0xff]
    %v910 = vld [vmem:[#allocation8 + $0x8] sm:$0xff]
    %v911 = vld [vmem:[#allocation8 + $0x10] sm:$0xff]
    %v912 = vld [vmem:[#allocation8 + $0x18] sm:$0xff]
    %v913 = vld [vmem:[#allocation8 + $0x20] sm:$0xff]
    %v914 = vld [vmem:[#allocation8 + $0x28] sm:$0xff]
    %v915 = vld [vmem:[#allocation8 + $0x30] sm:$0xff]
    %v916 = vld [vmem:[#allocation8 + $0x38] sm:$0xff]
    %v918 = vsel %vm105, %v908, 0
    %920 = vmatprep.subr.mxu0 0.0
    %921 = vmatpush1.msra.mxu0 %v909
    %922 = vmatprep.subr.mxu0 0.0
    %923 = vmatpush1.msra.mxu0 %v910
    %924 = vmatprep.subr.mxu0 0.0
    %925 = vmatpush1.msra.mxu0 %v911
    %926 = vmatprep.subr.mxu0 0.0
    %927 = vmatpush1.msra.mxu0 %v912
    %928 = vmatprep.subr.mxu0 0.0
    %929 = vmatpush1.msra.mxu0 %v913
    %930 = vmatprep.subr.mxu0 0.0
    %931 = vmatpush1.msra.mxu0 %v914
    %932 = vmatprep.subr.mxu0 0.0
    %933 = vmatpush1.msra.mxu0 %v915
    %934 = vmatprep.subr.mxu0 0.0
    %935 = vmatpush1.msra.mxu0 %v916
    %936 = vmatprep.subr.mxu0 0.0
    %937 = vmatpush1.msra.mxu0 0.0
    %938 = vmatprep.subr.mxu0 0.0
    %939 = vmatpush1.msra.mxu0 0.0
    %940 = vmatprep.subr.mxu0 0.0
    %941 = vmatpush1.msra.mxu0 0.0
    %942 = vmatprep.subr.mxu0 0.0
    %943 = vmatpush1.msra.mxu0 0.0
    %944 = vmatprep.subr.mxu0 0.0
    %945 = vmatpush1.msra.mxu0 0.0
    %946 = vmatprep.subr.mxu0 0.0
    %947 = vmatpush1.msra.mxu0 0.0
    %948 = vmatprep.subr.mxu0 0.0
    %949 = vmatpush1.msra.mxu0 0.0
    %950 = vmatprep.subr.mxu0 0.0
    %951 = vmatpush1.msra.mxu0 0.0
    %952 = vmatprep.subr.mxu0 0.0
    %953 = vmatpush1.msra.mxu0 0.0
    %954 = vmatprep.subr.mxu0 0.0
    %955 = vmatpush1.msra.mxu0 0.0
    %956 = vmatprep.subr.mxu0 0.0
    %957 = vmatpush1.msra.mxu0 0.0
    %958 = vmatprep.subr.mxu0 0.0
    %959 = vmatpush1.msra.mxu0 0.0
    %960 = vmatprep.subr.mxu0 0.0
    %961 = vmatpush1.msra.mxu0 0.0
    %962 = vmatprep.subr.mxu0 0.0
    %963 = vmatpush1.msra.mxu0 0.0
    %964 = vmatprep.subr.mxu0 0.0
    %965 = vmatpush1.msra.mxu0 0.0
    %966 = vmatprep.subr.mxu0 0.0
    %967 = vmatpush1.msra.mxu0 0.0
    %968 = vmatprep.subr.mxu0 0.0
    %969 = vmatpush1.msra.mxu0 0.0
    %970 = vmatprep.subr.mxu0 0.0
    %971 = vmatpush1.msra.mxu0 0.0
    %972 = vmatprep.subr.mxu0 0.0
    %973 = vmatpush1.msra.mxu0 0.0
    %974 = vmatprep.subr.mxu0 0.0
    %975 = vmatpush1.msra.mxu0 0.0
    %976 = vmatprep.subr.mxu0 0.0
    %977 = vmatpush1.msra.mxu0 0.0
    %978 = vmatprep.subr.mxu0 0.0
    %979 = vmatpush1.msra.mxu0 0.0
    %980 = vmatprep.subr.mxu0 0.0
    %981 = vmatpush1.msra.mxu0 0.0
    %982 = vmatprep.subr.mxu0 0.0
    %983 = vmatpush1.msra.mxu0 0.0
    %984 = vmatprep.mubr.f32.mxu0 0.0
    %985 = vmatmul.mubr.f32.gmra.mrb[0].mxu0 %v918
    %v986 = vpop.f32.mrb[0].mxu0
    %v987 = vadd.f32 %v79, %v986
    %v988 = vpop.f32.mrb[0].mxu0
    %989 = vdwg.mxu0
    %v990 = vxor.u32 %v987, 2147483648
    %v991 = vmul.f32 %v990, 1.442695
    %v992 = vpow.pop %v991
    %v993 = vadd.f32 %v992, 1.0
    %v994 = vrcp.pop %v993
    %v995 = vmul.f32 1.0, %v994
    %v996 = vtanh.pop %v987
    %v997 = vmul.f32 %v995, %v778
    %999 = vrot.lane.b32.xlu0 %v996, 64
    %v1000 = vpop.permute.xlu0 %999
    %v1002 = vmul.f32 %v995, %v1000
    %1004 = vrot.lane.b32.xlu0 %v1002, 32
    %v1005 = vpop.permute.xlu0 %1004
    %v1007 = vadd.f32 %v997, %v1005
    %v1008 = vtanh.pop %v1007
    %1010 = vrot.lane.b32.xlu0 %v1008, 64
    %v1011 = vpop.permute.xlu0 %1010
    %v1013 = vmul.f32 %v995, %v1011
    %s1014 = scalar_lea.vmem %s0, 8
    %v1015 = vld [vmem:[%s1014] sm:$0x3]
    %1016 = vst.msk [vmem:[#allocation2] sm:$0x3] %vm88, %v1015
    %1017 = vrot.lane.b32.xlu0 %v897, 64
    %v1018 = vpop.permute.xlu0 %1017
    %1020 = vst.msk [vmem:[#allocation2] sm:$0x3] %vm94, %v1018
    %v1021 = vld [vmem:[#allocation2] sm:$0x3]
    %v1022 = vld [vmem:[#allocation5] sm:$0xff]
    %v1023 = vld [vmem:[#allocation5 + $0x8] sm:$0xff]
    %v1024 = vld [vmem:[#allocation5 + $0x10] sm:$0xff]
    %v1025 = vld [vmem:[#allocation5 + $0x18] sm:$0xff]
    %v1026 = vld [vmem:[#allocation5 + $0x20] sm:$0xff]
    %v1027 = vld [vmem:[#allocation5 + $0x28] sm:$0xff]
    %v1028 = vld [vmem:[#allocation5 + $0x30] sm:$0xff]
    %v1029 = vld [vmem:[#allocation5 + $0x38] sm:$0xff]
    %v1031 = vsel %vm105, %v1021, 0
    %1033 = vmatprep.subr.mxu0 0.0
    %1034 = vmatpush1.msra.mxu0 %v1022
    %1035 = vmatprep.subr.mxu0 0.0
    %1036 = vmatpush1.msra.mxu0 %v1023
    %1037 = vmatprep.subr.mxu0 0.0
    %1038 = vmatpush1.msra.mxu0 %v1024
    %1039 = vmatprep.subr.mxu0 0.0
    %1040 = vmatpush1.msra.mxu0 %v1025
    %1041 = vmatprep.subr.mxu0 0.0
    %1042 = vmatpush1.msra.mxu0 %v1026
    %1043 = vmatprep.subr.mxu0 0.0
    %1044 = vmatpush1.msra.mxu0 %v1027
    %1045 = vmatprep.subr.mxu0 0.0
    %1046 = vmatpush1.msra.mxu0 %v1028
    %1047 = vmatprep.subr.mxu0 0.0
    %1048 = vmatpush1.msra.mxu0 %v1029
    %1049 = vmatprep.subr.mxu0 0.0
    %1050 = vmatpush1.msra.mxu0 0.0
    %1051 = vmatprep.subr.mxu0 0.0
    %1052 = vmatpush1.msra.mxu0 0.0
    %1053 = vmatprep.subr.mxu0 0.0
    %1054 = vmatpush1.msra.mxu0 0.0
    %1055 = vmatprep.subr.mxu0 0.0
    %1056 = vmatpush1.msra.mxu0 0.0
    %1057 = vmatprep.subr.mxu0 0.0
    %1058 = vmatpush1.msra.mxu0 0.0
    %1059 = vmatprep.subr.mxu0 0.0
    %1060 = vmatpush1.msra.mxu0 0.0
    %1061 = vmatprep.subr.mxu0 0.0
    %1062 = vmatpush1.msra.mxu0 0.0
    %1063 = vmatprep.subr.mxu0 0.0
    %1064 = vmatpush1.msra.mxu0 0.0
    %1065 = vmatprep.subr.mxu0 0.0
    %1066 = vmatpush1.msra.mxu0 0.0
    %1067 = vmatprep.subr.mxu0 0.0
    %1068 = vmatpush1.msra.mxu0 0.0
    %1069 = vmatprep.subr.mxu0 0.0
    %1070 = vmatpush1.msra.mxu0 0.0
    %1071 = vmatprep.subr.mxu0 0.0
    %1072 = vmatpush1.msra.mxu0 0.0
    %1073 = vmatprep.subr.mxu0 0.0
    %1074 = vmatpush1.msra.mxu0 0.0
    %1075 = vmatprep.subr.mxu0 0.0
    %1076 = vmatpush1.msra.mxu0 0.0
    %1077 = vmatprep.subr.mxu0 0.0
    %1078 = vmatpush1.msra.mxu0 0.0
    %1079 = vmatprep.subr.mxu0 0.0
    %1080 = vmatpush1.msra.mxu0 0.0
    %1081 = vmatprep.subr.mxu0 0.0
    %1082 = vmatpush1.msra.mxu0 0.0
    %1083 = vmatprep.subr.mxu0 0.0
    %1084 = vmatpush1.msra.mxu0 0.0
    %1085 = vmatprep.subr.mxu0 0.0
    %1086 = vmatpush1.msra.mxu0 0.0
    %1087 = vmatprep.subr.mxu0 0.0
    %1088 = vmatpush1.msra.mxu0 0.0
    %1089 = vmatprep.subr.mxu0 0.0
    %1090 = vmatpush1.msra.mxu0 0.0
    %1091 = vmatprep.subr.mxu0 0.0
    %1092 = vmatpush1.msra.mxu0 0.0
    %1093 = vmatprep.subr.mxu0 0.0
    %1094 = vmatpush1.msra.mxu0 0.0
    %1095 = vmatprep.subr.mxu0 0.0
    %1096 = vmatpush1.msra.mxu0 0.0
    %1097 = vmatprep.mubr.f32.mxu0 0.0
    %1098 = vmatmul.mubr.f32.gmra.mrb[0].mxu0 %v1031
    %v1099 = vpop.f32.mrb[0].mxu0
    %v1100 = vadd.f32 %v72, %v1099
    %v1101 = vpop.f32.mrb[0].mxu0
    %1102 = vdwg.mxu0
    %v1103 = vxor.u32 %v1100, 2147483648
    %v1104 = vmul.f32 %v1103, 1.442695
    %v1105 = vpow.pop %v1104
    %v1106 = vadd.f32 %v1105, 1.0
    %v1107 = vrcp.pop %v1106
    %v1108 = vmul.f32 1.0, %v1107
    %v1109 = vtanh.pop %v1100
    %v1110 = vmul.f32 %v1108, %v891
    %1112 = vrot.lane.b32.xlu0 %v1109, 64
    %v1113 = vpop.permute.xlu0 %1112
    %v1115 = vmul.f32 %v1108, %v1113
    %1117 = vrot.lane.b32.xlu0 %v1115, 32
    %v1118 = vpop.permute.xlu0 %1117
    %v1120 = vadd.f32 %v1110, %v1118
    %v1121 = vtanh.pop %v1120
    %1123 = vrot.lane.b32.xlu0 %v1121, 64
    %v1124 = vpop.permute.xlu0 %1123
    %v1126 = vmul.f32 %v1108, %v1124
    %1128 = vrot.lane.b32.xlu0 %v1126, 32
    %v1129 = vpop.permute.xlu0 %1128
    %1131 = vst.msk [vmem:[#allocation3] sm:$0x3] %vm88, %v1129
    %1133 = vrot.lane.b32.xlu0 %v1013, 64
    %v1134 = vpop.permute.xlu0 %1133
    %1136 = vst.msk [vmem:[#allocation3] sm:$0x3] %vm94, %v1134
    %v1137 = vld [vmem:[#allocation3] sm:$0x3]
    %v1138 = vld [vmem:[#allocation8] sm:$0xff]
    %v1139 = vld [vmem:[#allocation8 + $0x8] sm:$0xff]
    %v1140 = vld [vmem:[#allocation8 + $0x10] sm:$0xff]
    %v1141 = vld [vmem:[#allocation8 + $0x18] sm:$0xff]
    %v1142 = vld [vmem:[#allocation8 + $0x20] sm:$0xff]
    %v1143 = vld [vmem:[#allocation8 + $0x28] sm:$0xff]
    %v1144 = vld [vmem:[#allocation8 + $0x30] sm:$0xff]
    %v1145 = vld [vmem:[#allocation8 + $0x38] sm:$0xff]
    %v1147 = vsel %vm105, %v1137, 0
    %1149 = vmatprep.subr.mxu0 0.0
    %1150 = vmatpush1.msra.mxu0 %v1138
    %1151 = vmatprep.subr.mxu0 0.0
    %1152 = vmatpush1.msra.mxu0 %v1139
    %1153 = vmatprep.subr.mxu0 0.0
    %1154 = vmatpush1.msra.mxu0 %v1140
    %1155 = vmatprep.subr.mxu0 0.0
    %1156 = vmatpush1.msra.mxu0 %v1141
    %1157 = vmatprep.subr.mxu0 0.0
    %1158 = vmatpush1.msra.mxu0 %v1142
    %1159 = vmatprep.subr.mxu0 0.0
    %1160 = vmatpush1.msra.mxu0 %v1143
    %1161 = vmatprep.subr.mxu0 0.0
    %1162 = vmatpush1.msra.mxu0 %v1144
    %1163 = vmatprep.subr.mxu0 0.0
    %1164 = vmatpush1.msra.mxu0 %v1145
    %1165 = vmatprep.subr.mxu0 0.0
    %1166 = vmatpush1.msra.mxu0 0.0
    %1167 = vmatprep.subr.mxu0 0.0
    %1168 = vmatpush1.msra.mxu0 0.0
    %1169 = vmatprep.subr.mxu0 0.0
    %1170 = vmatpush1.msra.mxu0 0.0
    %1171 = vmatprep.subr.mxu0 0.0
    %1172 = vmatpush1.msra.mxu0 0.0
    %1173 = vmatprep.subr.mxu0 0.0
    %1174 = vmatpush1.msra.mxu0 0.0
    %1175 = vmatprep.subr.mxu0 0.0
    %1176 = vmatpush1.msra.mxu0 0.0
    %1177 = vmatprep.subr.mxu0 0.0
    %1178 = vmatpush1.msra.mxu0 0.0
    %1179 = vmatprep.subr.mxu0 0.0
    %1180 = vmatpush1.msra.mxu0 0.0
    %1181 = vmatprep.subr.mxu0 0.0
    %1182 = vmatpush1.msra.mxu0 0.0
    %1183 = vmatprep.subr.mxu0 0.0
    %1184 = vmatpush1.msra.mxu0 0.0
    %1185 = vmatprep.subr.mxu0 0.0
    %1186 = vmatpush1.msra.mxu0 0.0
    %1187 = vmatprep.subr.mxu0 0.0
    %1188 = vmatpush1.msra.mxu0 0.0
    %1189 = vmatprep.subr.mxu0 0.0
    %1190 = vmatpush1.msra.mxu0 0.0
    %1191 = vmatprep.subr.mxu0 0.0
    %1192 = vmatpush1.msra.mxu0 0.0
    %1193 = vmatprep.subr.mxu0 0.0
    %1194 = vmatpush1.msra.mxu0 0.0
    %1195 = vmatprep.subr.mxu0 0.0
    %1196 = vmatpush1.msra.mxu0 0.0
    %1197 = vmatprep.subr.mxu0 0.0
    %1198 = vmatpush1.msra.mxu0 0.0
    %1199 = vmatprep.subr.mxu0 0.0
    %1200 = vmatpush1.msra.mxu0 0.0
    %1201 = vmatprep.subr.mxu0 0.0
    %1202 = vmatpush1.msra.mxu0 0.0
    %1203 = vmatprep.subr.mxu0 0.0
    %1204 = vmatpush1.msra.mxu0 0.0
    %1205 = vmatprep.subr.mxu0 0.0
    %1206 = vmatpush1.msra.mxu0 0.0
    %1207 = vmatprep.subr.mxu0 0.0
    %1208 = vmatpush1.msra.mxu0 0.0
    %1209 = vmatprep.subr.mxu0 0.0
    %1210 = vmatpush1.msra.mxu0 0.0
    %1211 = vmatprep.subr.mxu0 0.0
    %1212 = vmatpush1.msra.mxu0 0.0
    %1213 = vmatprep.mubr.f32.mxu0 0.0
    %1214 = vmatmul.mubr.f32.gmra.mrb[0].mxu0 %v1147
    %v1215 = vpop.f32.mrb[0].mxu0
    %v1216 = vadd.f32 %v79, %v1215
    %v1217 = vpop.f32.mrb[0].mxu0
    %1218 = vdwg.mxu0
    %v1219 = vxor.u32 %v1216, 2147483648
    %v1220 = vmul.f32 %v1219, 1.442695
    %v1221 = vpow.pop %v1220
    %v1222 = vadd.f32 %v1221, 1.0
    %v1223 = vrcp.pop %v1222
    %v1224 = vmul.f32 1.0, %v1223
    %v1225 = vtanh.pop %v1216
    %v1226 = vmul.f32 %v1224, %v1007
    %1228 = vrot.lane.b32.xlu0 %v1225, 64
    %v1229 = vpop.permute.xlu0 %1228
    %v1231 = vmul.f32 %v1224, %v1229
    %1233 = vrot.lane.b32.xlu0 %v1231, 32
    %v1234 = vpop.permute.xlu0 %1233
    %v1236 = vadd.f32 %v1226, %v1234
    %v1237 = vtanh.pop %v1236
    %1239 = vrot.lane.b32.xlu0 %v1237, 64
    %v1240 = vpop.permute.xlu0 %1239
    %v1242 = vmul.f32 %v1224, %v1240
    %s1243 = scalar_lea.vmem %s0, 10
    %v1244 = vld [vmem:[%s1243] sm:$0x3]
    %1245 = vst.msk [vmem:[#allocation2] sm:$0x3] %vm88, %v1244
    %1246 = vrot.lane.b32.xlu0 %v1126, 64
    %v1247 = vpop.permute.xlu0 %1246
    %1249 = vst.msk [vmem:[#allocation2] sm:$0x3] %vm94, %v1247
    %v1250 = vld [vmem:[#allocation2] sm:$0x3]
    %v1251 = vld [vmem:[#allocation5] sm:$0xff]
    %v1252 = vld [vmem:[#allocation5 + $0x8] sm:$0xff]
    %v1253 = vld [vmem:[#allocation5 + $0x10] sm:$0xff]
    %v1254 = vld [vmem:[#allocation5 + $0x18] sm:$0xff]
    %v1255 = vld [vmem:[#allocation5 + $0x20] sm:$0xff]
    %v1256 = vld [vmem:[#allocation5 + $0x28] sm:$0xff]
    %v1257 = vld [vmem:[#allocation5 + $0x30] sm:$0xff]
    %v1258 = vld [vmem:[#allocation5 + $0x38] sm:$0xff]
    %v1260 = vsel %vm105, %v1250, 0
    %1262 = vmatprep.subr.mxu0 0.0
    %1263 = vmatpush1.msra.mxu0 %v1251
    %1264 = vmatprep.subr.mxu0 0.0
    %1265 = vmatpush1.msra.mxu0 %v1252
    %1266 = vmatprep.subr.mxu0 0.0
    %1267 = vmatpush1.msra.mxu0 %v1253
    %1268 = vmatprep.subr.mxu0 0.0
    %1269 = vmatpush1.msra.mxu0 %v1254
    %1270 = vmatprep.subr.mxu0 0.0
    %1271 = vmatpush1.msra.mxu0 %v1255
    %1272 = vmatprep.subr.mxu0 0.0
    %1273 = vmatpush1.msra.mxu0 %v1256
    %1274 = vmatprep.subr.mxu0 0.0
    %1275 = vmatpush1.msra.mxu0 %v1257
    %1276 = vmatprep.subr.mxu0 0.0
    %1277 = vmatpush1.msra.mxu0 %v1258
    %1278 = vmatprep.subr.mxu0 0.0
    %1279 = vmatpush1.msra.mxu0 0.0
    %1280 = vmatprep.subr.mxu0 0.0
    %1281 = vmatpush1.msra.mxu0 0.0
    %1282 = vmatprep.subr.mxu0 0.0
    %1283 = vmatpush1.msra.mxu0 0.0
    %1284 = vmatprep.subr.mxu0 0.0
    %1285 = vmatpush1.msra.mxu0 0.0
    %1286 = vmatprep.subr.mxu0 0.0
    %1287 = vmatpush1.msra.mxu0 0.0
    %1288 = vmatprep.subr.mxu0 0.0
    %1289 = vmatpush1.msra.mxu0 0.0
    %1290 = vmatprep.subr.mxu0 0.0
    %1291 = vmatpush1.msra.mxu0 0.0
    %1292 = vmatprep.subr.mxu0 0.0
    %1293 = vmatpush1.msra.mxu0 0.0
    %1294 = vmatprep.subr.mxu0 0.0
    %1295 = vmatpush1.msra.mxu0 0.0
    %1296 = vmatprep.subr.mxu0 0.0
    %1297 = vmatpush1.msra.mxu0 0.0
    %1298 = vmatprep.subr.mxu0 0.0
    %1299 = vmatpush1.msra.mxu0 0.0
    %1300 = vmatprep.subr.mxu0 0.0
    %1301 = vmatpush1.msra.mxu0 0.0
    %1302 = vmatprep.subr.mxu0 0.0
    %1303 = vmatpush1.msra.mxu0 0.0
    %1304 = vmatprep.subr.mxu0 0.0
    %1305 = vmatpush1.msra.mxu0 0.0
    %1306 = vmatprep.subr.mxu0 0.0
    %1307 = vmatpush1.msra.mxu0 0.0
    %1308 = vmatprep.subr.mxu0 0.0
    %1309 = vmatpush1.msra.mxu0 0.0
    %1310 = vmatprep.subr.mxu0 0.0
    %1311 = vmatpush1.msra.mxu0 0.0
    %1312 = vmatprep.subr.mxu0 0.0
    %1313 = vmatpush1.msra.mxu0 0.0
    %1314 = vmatprep.subr.mxu0 0.0
    %1315 = vmatpush1.msra.mxu0 0.0
    %1316 = vmatprep.subr.mxu0 0.0
    %1317 = vmatpush1.msra.mxu0 0.0
    %1318 = vmatprep.subr.mxu0 0.0
    %1319 = vmatpush1.msra.mxu0 0.0
    %1320 = vmatprep.subr.mxu0 0.0
    %1321 = vmatpush1.msra.mxu0 0.0
    %1322 = vmatprep.subr.mxu0 0.0
    %1323 = vmatpush1.msra.mxu0 0.0
    %1324 = vmatprep.subr.mxu0 0.0
    %1325 = vmatpush1.msra.mxu0 0.0
    %1326 = vmatprep.mubr.f32.mxu0 0.0
    %1327 = vmatmul.mubr.f32.gmra.mrb[0].mxu0 %v1260
    %v1328 = vpop.f32.mrb[0].mxu0
    %v1329 = vadd.f32 %v72, %v1328
    %v1330 = vpop.f32.mrb[0].mxu0
    %1331 = vdwg.mxu0
    %v1332 = vxor.u32 %v1329, 2147483648
    %v1333 = vmul.f32 %v1332, 1.442695
    %v1334 = vpow.pop %v1333
    %v1335 = vadd.f32 %v1334, 1.0
    %v1336 = vrcp.pop %v1335
    %v1337 = vmul.f32 1.0, %v1336
    %v1338 = vtanh.pop %v1329
    %v1339 = vmul.f32 %v1337, %v1120
    %1341 = vrot.lane.b32.xlu0 %v1338, 64
    %v1342 = vpop.permute.xlu0 %1341
    %v1344 = vmul.f32 %v1337, %v1342
    %1346 = vrot.lane.b32.xlu0 %v1344, 32
    %v1347 = vpop.permute.xlu0 %1346
    %v1349 = vadd.f32 %v1339, %v1347
    %v1350 = vtanh.pop %v1349
    %1352 = vrot.lane.b32.xlu0 %v1350, 64
    %v1353 = vpop.permute.xlu0 %1352
    %v1355 = vmul.f32 %v1337, %v1353
    %1357 = vrot.lane.b32.xlu0 %v1355, 32
    %v1358 = vpop.permute.xlu0 %1357
    %1360 = vst.msk [vmem:[#allocation3] sm:$0x3] %vm88, %v1358
    %1362 = vrot.lane.b32.xlu0 %v1242, 64
    %v1363 = vpop.permute.xlu0 %1362
    %1365 = vst.msk [vmem:[#allocation3] sm:$0x3] %vm94, %v1363
    %v1366 = vld [vmem:[#allocation3] sm:$0x3]
    %v1367 = vld [vmem:[#allocation8] sm:$0xff]
    %v1368 = vld [vmem:[#allocation8 + $0x8] sm:$0xff]
    %v1369 = vld [vmem:[#allocation8 + $0x10] sm:$0xff]
    %v1370 = vld [vmem:[#allocation8 + $0x18] sm:$0xff]
    %v1371 = vld [vmem:[#allocation8 + $0x20] sm:$0xff]
    %v1372 = vld [vmem:[#allocation8 + $0x28] sm:$0xff]
    %v1373 = vld [vmem:[#allocation8 + $0x30] sm:$0xff]
    %v1374 = vld [vmem:[#allocation8 + $0x38] sm:$0xff]
    %v1376 = vsel %vm105, %v1366, 0
    %1378 = vmatprep.subr.mxu0 0.0
    %1379 = vmatpush1.msra.mxu0 %v1367
    %1380 = vmatprep.subr.mxu0 0.0
    %1381 = vmatpush1.msra.mxu0 %v1368
    %1382 = vmatprep.subr.mxu0 0.0
    %1383 = vmatpush1.msra.mxu0 %v1369
    %1384 = vmatprep.subr.mxu0 0.0
    %1385 = vmatpush1.msra.mxu0 %v1370
    %1386 = vmatprep.subr.mxu0 0.0
    %1387 = vmatpush1.msra.mxu0 %v1371
    %1388 = vmatprep.subr.mxu0 0.0
    %1389 = vmatpush1.msra.mxu0 %v1372
    %1390 = vmatprep.subr.mxu0 0.0
    %1391 = vmatpush1.msra.mxu0 %v1373
    %1392 = vmatprep.subr.mxu0 0.0
    %1393 = vmatpush1.msra.mxu0 %v1374
    %1394 = vmatprep.subr.mxu0 0.0
    %1395 = vmatpush1.msra.mxu0 0.0
    %1396 = vmatprep.subr.mxu0 0.0
    %1397 = vmatpush1.msra.mxu0 0.0
    %1398 = vmatprep.subr.mxu0 0.0
    %1399 = vmatpush1.msra.mxu0 0.0
    %1400 = vmatprep.subr.mxu0 0.0
    %1401 = vmatpush1.msra.mxu0 0.0
    %1402 = vmatprep.subr.mxu0 0.0
    %1403 = vmatpush1.msra.mxu0 0.0
    %1404 = vmatprep.subr.mxu0 0.0
    %1405 = vmatpush1.msra.mxu0 0.0
    %1406 = vmatprep.subr.mxu0 0.0
    %1407 = vmatpush1.msra.mxu0 0.0
    %1408 = vmatprep.subr.mxu0 0.0
    %1409 = vmatpush1.msra.mxu0 0.0
    %1410 = vmatprep.subr.mxu0 0.0
    %1411 = vmatpush1.msra.mxu0 0.0
    %1412 = vmatprep.subr.mxu0 0.0
    %1413 = vmatpush1.msra.mxu0 0.0
    %1414 = vmatprep.subr.mxu0 0.0
    %1415 = vmatpush1.msra.mxu0 0.0
    %1416 = vmatprep.subr.mxu0 0.0
    %1417 = vmatpush1.msra.mxu0 0.0
    %1418 = vmatprep.subr.mxu0 0.0
    %1419 = vmatpush1.msra.mxu0 0.0
    %1420 = vmatprep.subr.mxu0 0.0
    %1421 = vmatpush1.msra.mxu0 0.0
    %1422 = vmatprep.subr.mxu0 0.0
    %1423 = vmatpush1.msra.mxu0 0.0
    %1424 = vmatprep.subr.mxu0 0.0
    %1425 = vmatpush1.msra.mxu0 0.0
    %1426 = vmatprep.subr.mxu0 0.0
    %1427 = vmatpush1.msra.mxu0 0.0
    %1428 = vmatprep.subr.mxu0 0.0
    %1429 = vmatpush1.msra.mxu0 0.0
    %1430 = vmatprep.subr.mxu0 0.0
    %1431 = vmatpush1.msra.mxu0 0.0
    %1432 = vmatprep.subr.mxu0 0.0
    %1433 = vmatpush1.msra.mxu0 0.0
    %1434 = vmatprep.subr.mxu0 0.0
    %1435 = vmatpush1.msra.mxu0 0.0
    %1436 = vmatprep.subr.mxu0 0.0
    %1437 = vmatpush1.msra.mxu0 0.0
    %1438 = vmatprep.subr.mxu0 0.0
    %1439 = vmatpush1.msra.mxu0 0.0
    %1440 = vmatprep.subr.mxu0 0.0
    %1441 = vmatpush1.msra.mxu0 0.0
    %1442 = vmatprep.mubr.f32.mxu0 0.0
    %1443 = vmatmul.mubr.f32.gmra.mrb[0].mxu0 %v1376
    %v1444 = vpop.f32.mrb[0].mxu0
    %v1445 = vadd.f32 %v79, %v1444
    %v1446 = vpop.f32.mrb[0].mxu0
    %1447 = vdwg.mxu0
    %v1448 = vxor.u32 %v1445, 2147483648
    %v1449 = vmul.f32 %v1448, 1.442695
    %v1450 = vpow.pop %v1449
    %v1451 = vadd.f32 %v1450, 1.0
    %v1452 = vrcp.pop %v1451
    %v1453 = vmul.f32 1.0, %v1452
    %v1454 = vtanh.pop %v1445
    %v1455 = vmul.f32 %v1453, %v1236
    %1457 = vrot.lane.b32.xlu0 %v1454, 64
    %v1458 = vpop.permute.xlu0 %1457
    %v1460 = vmul.f32 %v1453, %v1458
    %1462 = vrot.lane.b32.xlu0 %v1460, 32
    %v1463 = vpop.permute.xlu0 %1462
    %v1465 = vadd.f32 %v1455, %v1463
    %v1466 = vtanh.pop %v1465
    %1468 = vrot.lane.b32.xlu0 %v1466, 64
    %v1469 = vpop.permute.xlu0 %1468
    %v1471 = vmul.f32 %v1453, %v1469
    %s1472 = scalar_lea.vmem %s0, 12
    %v1473 = vld [vmem:[%s1472] sm:$0x3]
    %1474 = vst.msk [vmem:[#allocation2] sm:$0x3] %vm88, %v1473
    %1475 = vrot.lane.b32.xlu0 %v1355, 64
    %v1476 = vpop.permute.xlu0 %1475
    %1478 = vst.msk [vmem:[#allocation2] sm:$0x3] %vm94, %v1476
    %v1479 = vld [vmem:[#allocation2] sm:$0x3]
    %v1480 = vld [vmem:[#allocation5] sm:$0xff]
    %v1481 = vld [vmem:[#allocation5 + $0x8] sm:$0xff]
    %v1482 = vld [vmem:[#allocation5 + $0x10] sm:$0xff]
    %v1483 = vld [vmem:[#allocation5 + $0x18] sm:$0xff]
    %v1484 = vld [vmem:[#allocation5 + $0x20] sm:$0xff]
    %v1485 = vld [vmem:[#allocation5 + $0x28] sm:$0xff]
    %v1486 = vld [vmem:[#allocation5 + $0x30] sm:$0xff]
    %v1487 = vld [vmem:[#allocation5 + $0x38] sm:$0xff]
    %v1489 = vsel %vm105, %v1479, 0
    %1491 = vmatprep.subr.mxu0 0.0
    %1492 = vmatpush1.msra.mxu0 %v1480
    %1493 = vmatprep.subr.mxu0 0.0
    %1494 = vmatpush1.msra.mxu0 %v1481
    %1495 = vmatprep.subr.mxu0 0.0
    %1496 = vmatpush1.msra.mxu0 %v1482
    %1497 = vmatprep.subr.mxu0 0.0
    %1498 = vmatpush1.msra.mxu0 %v1483
    %1499 = vmatprep.subr.mxu0 0.0
    %1500 = vmatpush1.msra.mxu0 %v1484
    %1501 = vmatprep.subr.mxu0 0.0
    %1502 = vmatpush1.msra.mxu0 %v1485
    %1503 = vmatprep.subr.mxu0 0.0
    %1504 = vmatpush1.msra.mxu0 %v1486
    %1505 = vmatprep.subr.mxu0 0.0
    %1506 = vmatpush1.msra.mxu0 %v1487
    %1507 = vmatprep.subr.mxu0 0.0
    %1508 = vmatpush1.msra.mxu0 0.0
    %1509 = vmatprep.subr.mxu0 0.0
    %1510 = vmatpush1.msra.mxu0 0.0
    %1511 = vmatprep.subr.mxu0 0.0
    %1512 = vmatpush1.msra.mxu0 0.0
    %1513 = vmatprep.subr.mxu0 0.0
    %1514 = vmatpush1.msra.mxu0 0.0
    %1515 = vmatprep.subr.mxu0 0.0
    %1516 = vmatpush1.msra.mxu0 0.0
    %1517 = vmatprep.subr.mxu0 0.0
    %1518 = vmatpush1.msra.mxu0 0.0
    %1519 = vmatprep.subr.mxu0 0.0
    %1520 = vmatpush1.msra.mxu0 0.0
    %1521 = vmatprep.subr.mxu0 0.0
    %1522 = vmatpush1.msra.mxu0 0.0
    %1523 = vmatprep.subr.mxu0 0.0
    %1524 = vmatpush1.msra.mxu0 0.0
    %1525 = vmatprep.subr.mxu0 0.0
    %1526 = vmatpush1.msra.mxu0 0.0
    %1527 = vmatprep.subr.mxu0 0.0
    %1528 = vmatpush1.msra.mxu0 0.0
    %1529 = vmatprep.subr.mxu0 0.0
    %1530 = vmatpush1.msra.mxu0 0.0
    %1531 = vmatprep.subr.mxu0 0.0
    %1532 = vmatpush1.msra.mxu0 0.0
    %1533 = vmatprep.subr.mxu0 0.0
    %1534 = vmatpush1.msra.mxu0 0.0
    %1535 = vmatprep.subr.mxu0 0.0
    %1536 = vmatpush1.msra.mxu0 0.0
    %1537 = vmatprep.subr.mxu0 0.0
    %1538 = vmatpush1.msra.mxu0 0.0
    %1539 = vmatprep.subr.mxu0 0.0
    %1540 = vmatpush1.msra.mxu0 0.0
    %1541 = vmatprep.subr.mxu0 0.0
    %1542 = vmatpush1.msra.mxu0 0.0
    %1543 = vmatprep.subr.mxu0 0.0
    %1544 = vmatpush1.msra.mxu0 0.0
    %1545 = vmatprep.subr.mxu0 0.0
    %1546 = vmatpush1.msra.mxu0 0.0
    %1547 = vmatprep.subr.mxu0 0.0
    %1548 = vmatpush1.msra.mxu0 0.0
    %1549 = vmatprep.subr.mxu0 0.0
    %1550 = vmatpush1.msra.mxu0 0.0
    %1551 = vmatprep.subr.mxu0 0.0
    %1552 = vmatpush1.msra.mxu0 0.0
    %1553 = vmatprep.subr.mxu0 0.0
    %1554 = vmatpush1.msra.mxu0 0.0
    %1555 = vmatprep.mubr.f32.mxu0 0.0
    %1556 = vmatmul.mubr.f32.gmra.mrb[0].mxu0 %v1489
    %v1557 = vpop.f32.mrb[0].mxu0
    %v1558 = vadd.f32 %v72, %v1557
    %v1559 = vpop.f32.mrb[0].mxu0
    %1560 = vdwg.mxu0
    %v1561 = vxor.u32 %v1558, 2147483648
    %v1562 = vmul.f32 %v1561, 1.442695
    %v1563 = vpow.pop %v1562
    %v1564 = vadd.f32 %v1563, 1.0
    %v1565 = vrcp.pop %v1564
    %v1566 = vmul.f32 1.0, %v1565
    %v1567 = vtanh.pop %v1558
    %v1568 = vmul.f32 %v1566, %v1349
    %1570 = vrot.lane.b32.xlu0 %v1567, 64
    %v1571 = vpop.permute.xlu0 %1570
    %v1573 = vmul.f32 %v1566, %v1571
    %1575 = vrot.lane.b32.xlu0 %v1573, 32
    %v1576 = vpop.permute.xlu0 %1575
    %v1578 = vadd.f32 %v1568, %v1576
    %v1579 = vtanh.pop %v1578
    %1581 = vrot.lane.b32.xlu0 %v1579, 64
    %v1582 = vpop.permute.xlu0 %1581
    %v1584 = vmul.f32 %v1566, %v1582
    %1586 = vrot.lane.b32.xlu0 %v1584, 32
    %v1587 = vpop.permute.xlu0 %1586
    %1589 = vst.msk [vmem:[#allocation3] sm:$0x3] %vm88, %v1587
    %1591 = vrot.lane.b32.xlu0 %v1471, 64
    %v1592 = vpop.permute.xlu0 %1591
    %1594 = vst.msk [vmem:[#allocation3] sm:$0x3] %vm94, %v1592
    %v1595 = vld [vmem:[#allocation3] sm:$0x3]
    %v1596 = vld [vmem:[#allocation8] sm:$0xff]
    %v1597 = vld [vmem:[#allocation8 + $0x8] sm:$0xff]
    %v1598 = vld [vmem:[#allocation8 + $0x10] sm:$0xff]
    %v1599 = vld [vmem:[#allocation8 + $0x18] sm:$0xff]
    %v1600 = vld [vmem:[#allocation8 + $0x20] sm:$0xff]
    %v1601 = vld [vmem:[#allocation8 + $0x28] sm:$0xff]
    %v1602 = vld [vmem:[#allocation8 + $0x30] sm:$0xff]
    %v1603 = vld [vmem:[#allocation8 + $0x38] sm:$0xff]
    %v1605 = vsel %vm105, %v1595, 0
    %1607 = vmatprep.subr.mxu0 0.0
    %1608 = vmatpush1.msra.mxu0 %v1596
    %1609 = vmatprep.subr.mxu0 0.0
    %1610 = vmatpush1.msra.mxu0 %v1597
    %1611 = vmatprep.subr.mxu0 0.0
    %1612 = vmatpush1.msra.mxu0 %v1598
    %1613 = vmatprep.subr.mxu0 0.0
    %1614 = vmatpush1.msra.mxu0 %v1599
    %1615 = vmatprep.subr.mxu0 0.0
    %1616 = vmatpush1.msra.mxu0 %v1600
    %1617 = vmatprep.subr.mxu0 0.0
    %1618 = vmatpush1.msra.mxu0 %v1601
    %1619 = vmatprep.subr.mxu0 0.0
    %1620 = vmatpush1.msra.mxu0 %v1602
    %1621 = vmatprep.subr.mxu0 0.0
    %1622 = vmatpush1.msra.mxu0 %v1603
    %1623 = vmatprep.subr.mxu0 0.0
    %1624 = vmatpush1.msra.mxu0 0.0
    %1625 = vmatprep.subr.mxu0 0.0
    %1626 = vmatpush1.msra.mxu0 0.0
    %1627 = vmatprep.subr.mxu0 0.0
    %1628 = vmatpush1.msra.mxu0 0.0
    %1629 = vmatprep.subr.mxu0 0.0
    %1630 = vmatpush1.msra.mxu0 0.0
    %1631 = vmatprep.subr.mxu0 0.0
    %1632 = vmatpush1.msra.mxu0 0.0
    %1633 = vmatprep.subr.mxu0 0.0
    %1634 = vmatpush1.msra.mxu0 0.0
    %1635 = vmatprep.subr.mxu0 0.0
    %1636 = vmatpush1.msra.mxu0 0.0
    %1637 = vmatprep.subr.mxu0 0.0
    %1638 = vmatpush1.msra.mxu0 0.0
    %1639 = vmatprep.subr.mxu0 0.0
    %1640 = vmatpush1.msra.mxu0 0.0
    %1641 = vmatprep.subr.mxu0 0.0
    %1642 = vmatpush1.msra.mxu0 0.0
    %1643 = vmatprep.subr.mxu0 0.0
    %1644 = vmatpush1.msra.mxu0 0.0
    %1645 = vmatprep.subr.mxu0 0.0
    %1646 = vmatpush1.msra.mxu0 0.0
    %1647 = vmatprep.subr.mxu0 0.0
    %1648 = vmatpush1.msra.mxu0 0.0
    %1649 = vmatprep.subr.mxu0 0.0
    %1650 = vmatpush1.msra.mxu0 0.0
    %1651 = vmatprep.subr.mxu0 0.0
    %1652 = vmatpush1.msra.mxu0 0.0
    %1653 = vmatprep.subr.mxu0 0.0
    %1654 = vmatpush1.msra.mxu0 0.0
    %1655 = vmatprep.subr.mxu0 0.0
    %1656 = vmatpush1.msra.mxu0 0.0
    %1657 = vmatprep.subr.mxu0 0.0
    %1658 = vmatpush1.msra.mxu0 0.0
    %1659 = vmatprep.subr.mxu0 0.0
    %1660 = vmatpush1.msra.mxu0 0.0
    %1661 = vmatprep.subr.mxu0 0.0
    %1662 = vmatpush1.msra.mxu0 0.0
    %1663 = vmatprep.subr.mxu0 0.0
    %1664 = vmatpush1.msra.mxu0 0.0
    %1665 = vmatprep.subr.mxu0 0.0
    %1666 = vmatpush1.msra.mxu0 0.0
    %1667 = vmatprep.subr.mxu0 0.0
    %1668 = vmatpush1.msra.mxu0 0.0
    %1669 = vmatprep.subr.mxu0 0.0
    %1670 = vmatpush1.msra.mxu0 0.0
    %1671 = vmatprep.mubr.f32.mxu0 0.0
    %1672 = vmatmul.mubr.f32.gmra.mrb[0].mxu0 %v1605
    %v1673 = vpop.f32.mrb[0].mxu0
    %v1674 = vadd.f32 %v79, %v1673
    %v1675 = vpop.f32.mrb[0].mxu0
    %1676 = vdwg.mxu0
    %v1677 = vxor.u32 %v1674, 2147483648
    %v1678 = vmul.f32 %v1677, 1.442695
    %v1679 = vpow.pop %v1678
    %v1680 = vadd.f32 %v1679, 1.0
    %v1681 = vrcp.pop %v1680
    %v1682 = vmul.f32 1.0, %v1681
    %v1683 = vtanh.pop %v1674
    %v1684 = vmul.f32 %v1682, %v1465
    %1686 = vrot.lane.b32.xlu0 %v1683, 64
    %v1687 = vpop.permute.xlu0 %1686
    %v1689 = vmul.f32 %v1682, %v1687
    %1691 = vrot.lane.b32.xlu0 %v1689, 32
    %v1692 = vpop.permute.xlu0 %1691
    %v1694 = vadd.f32 %v1684, %v1692
    %v1695 = vtanh.pop %v1694
    %1697 = vrot.lane.b32.xlu0 %v1695, 64
    %v1698 = vpop.permute.xlu0 %1697
    %v1700 = vmul.f32 %v1682, %v1698
    %s1701 = scalar_lea.vmem %s0, 14
    %v1702 = vld [vmem:[%s1701] sm:$0x3]
    %1703 = vst.msk [vmem:[#allocation2] sm:$0x3] %vm88, %v1702
    %1704 = vrot.lane.b32.xlu0 %v1584, 64
    %v1705 = vpop.permute.xlu0 %1704
    %1707 = vst.msk [vmem:[#allocation2] sm:$0x3] %vm94, %v1705
    %v1708 = vld [vmem:[#allocation2] sm:$0x3]
    %v1709 = vld [vmem:[#allocation5] sm:$0xff]
    %v1710 = vld [vmem:[#allocation5 + $0x8] sm:$0xff]
    %v1711 = vld [vmem:[#allocation5 + $0x10] sm:$0xff]
    %v1712 = vld [vmem:[#allocation5 + $0x18] sm:$0xff]
    %v1713 = vld [vmem:[#allocation5 + $0x20] sm:$0xff]
    %v1714 = vld [vmem:[#allocation5 + $0x28] sm:$0xff]
    %v1715 = vld [vmem:[#allocation5 + $0x30] sm:$0xff]
    %v1716 = vld [vmem:[#allocation5 + $0x38] sm:$0xff]
    %v1718 = vsel %vm105, %v1708, 0
    %1720 = vmatprep.subr.mxu0 0.0
    %1721 = vmatpush1.msra.mxu0 %v1709
    %1722 = vmatprep.subr.mxu0 0.0
    %1723 = vmatpush1.msra.mxu0 %v1710
    %1724 = vmatprep.subr.mxu0 0.0
    %1725 = vmatpush1.msra.mxu0 %v1711
    %1726 = vmatprep.subr.mxu0 0.0
    %1727 = vmatpush1.msra.mxu0 %v1712
    %1728 = vmatprep.subr.mxu0 0.0
    %1729 = vmatpush1.msra.mxu0 %v1713
    %1730 = vmatprep.subr.mxu0 0.0
    %1731 = vmatpush1.msra.mxu0 %v1714
    %1732 = vmatprep.subr.mxu0 0.0
    %1733 = vmatpush1.msra.mxu0 %v1715
    %1734 = vmatprep.subr.mxu0 0.0
    %1735 = vmatpush1.msra.mxu0 %v1716
    %1736 = vmatprep.subr.mxu0 0.0
    %1737 = vmatpush1.msra.mxu0 0.0
    %1738 = vmatprep.subr.mxu0 0.0
    %1739 = vmatpush1.msra.mxu0 0.0
    %1740 = vmatprep.subr.mxu0 0.0
    %1741 = vmatpush1.msra.mxu0 0.0
    %1742 = vmatprep.subr.mxu0 0.0
    %1743 = vmatpush1.msra.mxu0 0.0
    %1744 = vmatprep.subr.mxu0 0.0
    %1745 = vmatpush1.msra.mxu0 0.0
    %1746 = vmatprep.subr.mxu0 0.0
    %1747 = vmatpush1.msra.mxu0 0.0
    %1748 = vmatprep.subr.mxu0 0.0
    %1749 = vmatpush1.msra.mxu0 0.0
    %1750 = vmatprep.subr.mxu0 0.0
    %1751 = vmatpush1.msra.mxu0 0.0
    %1752 = vmatprep.subr.mxu0 0.0
    %1753 = vmatpush1.msra.mxu0 0.0
    %1754 = vmatprep.subr.mxu0 0.0
    %1755 = vmatpush1.msra.mxu0 0.0
    %1756 = vmatprep.subr.mxu0 0.0
    %1757 = vmatpush1.msra.mxu0 0.0
    %1758 = vmatprep.subr.mxu0 0.0
    %1759 = vmatpush1.msra.mxu0 0.0
    %1760 = vmatprep.subr.mxu0 0.0
    %1761 = vmatpush1.msra.mxu0 0.0
    %1762 = vmatprep.subr.mxu0 0.0
    %1763 = vmatpush1.msra.mxu0 0.0
    %1764 = vmatprep.subr.mxu0 0.0
    %1765 = vmatpush1.msra.mxu0 0.0
    %1766 = vmatprep.subr.mxu0 0.0
    %1767 = vmatpush1.msra.mxu0 0.0
    %1768 = vmatprep.subr.mxu0 0.0
    %1769 = vmatpush1.msra.mxu0 0.0
    %1770 = vmatprep.subr.mxu0 0.0
    %1771 = vmatpush1.msra.mxu0 0.0
    %1772 = vmatprep.subr.mxu0 0.0
    %1773 = vmatpush1.msra.mxu0 0.0
    %1774 = vmatprep.subr.mxu0 0.0
    %1775 = vmatpush1.msra.mxu0 0.0
    %1776 = vmatprep.subr.mxu0 0.0
    %1777 = vmatpush1.msra.mxu0 0.0
    %1778 = vmatprep.subr.mxu0 0.0
    %1779 = vmatpush1.msra.mxu0 0.0
    %1780 = vmatprep.subr.mxu0 0.0
    %1781 = vmatpush1.msra.mxu0 0.0
    %1782 = vmatprep.subr.mxu0 0.0
    %1783 = vmatpush1.msra.mxu0 0.0
    %1784 = vmatprep.mubr.f32.mxu0 0.0
    %1785 = vmatmul.mubr.f32.gmra.mrb[0].mxu0 %v1718
    %v1786 = vpop.f32.mrb[0].mxu0
    %v1787 = vadd.f32 %v72, %v1786
    %v1788 = vpop.f32.mrb[0].mxu0
    %1789 = vdwg.mxu0
    %v1790 = vxor.u32 %v1787, 2147483648
    %v1791 = vmul.f32 %v1790, 1.442695
    %v1792 = vpow.pop %v1791
    %v1793 = vadd.f32 %v1792, 1.0
    %v1794 = vrcp.pop %v1793
    %v1795 = vmul.f32 1.0, %v1794
    %v1796 = vtanh.pop %v1787
    %v1797 = vmul.f32 %v1795, %v1578
    %1799 = vrot.lane.b32.xlu0 %v1796, 64
    %v1800 = vpop.permute.xlu0 %1799
    %v1802 = vmul.f32 %v1795, %v1800
    %1804 = vrot.lane.b32.xlu0 %v1802, 32
    %v1805 = vpop.permute.xlu0 %1804
    %v1807 = vadd.f32 %v1797, %v1805
    %v1808 = vtanh.pop %v1807
    %1810 = vrot.lane.b32.xlu0 %v1808, 64
    %v1811 = vpop.permute.xlu0 %1810
    %v1813 = vmul.f32 %v1795, %v1811
    %1815 = vrot.lane.b32.xlu0 %v1813, 32
    %v1816 = vpop.permute.xlu0 %1815
    %1818 = vst.msk [vmem:[#allocation3] sm:$0x3] %vm88, %v1816
    %1820 = vrot.lane.b32.xlu0 %v1700, 64
    %v1821 = vpop.permute.xlu0 %1820
    %1823 = vst.msk [vmem:[#allocation3] sm:$0x3] %vm94, %v1821
    %v1824 = vld [vmem:[#allocation3] sm:$0x3]
    %v1825 = vld [vmem:[#allocation8] sm:$0xff]
    %v1826 = vld [vmem:[#allocation8 + $0x8] sm:$0xff]
    %v1827 = vld [vmem:[#allocation8 + $0x10] sm:$0xff]
    %v1828 = vld [vmem:[#allocation8 + $0x18] sm:$0xff]
    %v1829 = vld [vmem:[#allocation8 + $0x20] sm:$0xff]
    %v1830 = vld [vmem:[#allocation8 + $0x28] sm:$0xff]
    %v1831 = vld [vmem:[#allocation8 + $0x30] sm:$0xff]
    %v1832 = vld [vmem:[#allocation8 + $0x38] sm:$0xff]
    %v1834 = vsel %vm105, %v1824, 0
    %1836 = vmatprep.subr.mxu0 0.0
    %1837 = vmatpush1.msra.mxu0 %v1825
    %1838 = vmatprep.subr.mxu0 0.0
    %1839 = vmatpush1.msra.mxu0 %v1826
    %1840 = vmatprep.subr.mxu0 0.0
    %1841 = vmatpush1.msra.mxu0 %v1827
    %1842 = vmatprep.subr.mxu0 0.0
    %1843 = vmatpush1.msra.mxu0 %v1828
    %1844 = vmatprep.subr.mxu0 0.0
    %1845 = vmatpush1.msra.mxu0 %v1829
    %1846 = vmatprep.subr.mxu0 0.0
    %1847 = vmatpush1.msra.mxu0 %v1830
    %1848 = vmatprep.subr.mxu0 0.0
    %1849 = vmatpush1.msra.mxu0 %v1831
    %1850 = vmatprep.subr.mxu0 0.0
    %1851 = vmatpush1.msra.mxu0 %v1832
    %1852 = vmatprep.subr.mxu0 0.0
    %1853 = vmatpush1.msra.mxu0 0.0
    %1854 = vmatprep.subr.mxu0 0.0
    %1855 = vmatpush1.msra.mxu0 0.0
    %1856 = vmatprep.subr.mxu0 0.0
    %1857 = vmatpush1.msra.mxu0 0.0
    %1858 = vmatprep.subr.mxu0 0.0
    %1859 = vmatpush1.msra.mxu0 0.0
    %1860 = vmatprep.subr.mxu0 0.0
    %1861 = vmatpush1.msra.mxu0 0.0
    %1862 = vmatprep.subr.mxu0 0.0
    %1863 = vmatpush1.msra.mxu0 0.0
    %1864 = vmatprep.subr.mxu0 0.0
    %1865 = vmatpush1.msra.mxu0 0.0
    %1866 = vmatprep.subr.mxu0 0.0
    %1867 = vmatpush1.msra.mxu0 0.0
    %1868 = vmatprep.subr.mxu0 0.0
    %1869 = vmatpush1.msra.mxu0 0.0
    %1870 = vmatprep.subr.mxu0 0.0
    %1871 = vmatpush1.msra.mxu0 0.0
    %1872 = vmatprep.subr.mxu0 0.0
    %1873 = vmatpush1.msra.mxu0 0.0
    %1874 = vmatprep.subr.mxu0 0.0
    %1875 = vmatpush1.msra.mxu0 0.0
    %1876 = vmatprep.subr.mxu0 0.0
    %1877 = vmatpush1.msra.mxu0 0.0
    %1878 = vmatprep.subr.mxu0 0.0
    %1879 = vmatpush1.msra.mxu0 0.0
    %1880 = vmatprep.subr.mxu0 0.0
    %1881 = vmatpush1.msra.mxu0 0.0
    %1882 = vmatprep.subr.mxu0 0.0
    %1883 = vmatpush1.msra.mxu0 0.0
    %1884 = vmatprep.subr.mxu0 0.0
    %1885 = vmatpush1.msra.mxu0 0.0
    %1886 = vmatprep.subr.mxu0 0.0
    %1887 = vmatpush1.msra.mxu0 0.0
    %1888 = vmatprep.subr.mxu0 0.0
    %1889 = vmatpush1.msra.mxu0 0.0
    %1890 = vmatprep.subr.mxu0 0.0
    %1891 = vmatpush1.msra.mxu0 0.0
    %1892 = vmatprep.subr.mxu0 0.0
    %1893 = vmatpush1.msra.mxu0 0.0
    %1894 = vmatprep.subr.mxu0 0.0
    %1895 = vmatpush1.msra.mxu0 0.0
    %1896 = vmatprep.subr.mxu0 0.0
    %1897 = vmatpush1.msra.mxu0 0.0
    %1898 = vmatprep.subr.mxu0 0.0
    %1899 = vmatpush1.msra.mxu0 0.0
    %1900 = vmatprep.mubr.f32.mxu0 0.0
    %1901 = vmatmul.mubr.f32.gmra.mrb[0].mxu0 %v1834
    %v1902 = vpop.f32.mrb[0].mxu0
    %v1903 = vadd.f32 %v79, %v1902
    %v1904 = vpop.f32.mrb[0].mxu0
    %1905 = vdwg.mxu0
    %v1906 = vxor.u32 %v1903, 2147483648
    %v1907 = vmul.f32 %v1906, 1.442695
    %v1908 = vpow.pop %v1907
    %v1909 = vadd.f32 %v1908, 1.0
    %v1910 = vrcp.pop %v1909
    %v1911 = vmul.f32 1.0, %v1910
    %v1912 = vtanh.pop %v1903
    %v1913 = vmul.f32 %v1911, %v1694
    %1915 = vrot.lane.b32.xlu0 %v1912, 64
    %v1916 = vpop.permute.xlu0 %1915
    %v1918 = vmul.f32 %v1911, %v1916
    %1920 = vrot.lane.b32.xlu0 %v1918, 32
    %v1921 = vpop.permute.xlu0 %1920
    %v1923 = vadd.f32 %v1913, %v1921
    %v1924 = vtanh.pop %v1923
    %1926 = vrot.lane.b32.xlu0 %v1924, 64
    %v1927 = vpop.permute.xlu0 %1926
    %v1929 = vmul.f32 %v1911, %v1927
    %1930 = vst.msk [vmem:[#allocation10] sm:$0x3] %vm88, %v1816
    %1932 = vrot.lane.b32.xlu0 %v1807, 96
    %v1933 = vpop.permute.xlu0 %1932
    %1935 = vst.msk [vmem:[#allocation11] sm:$0x3] %vm88, %v1933
    %1937 = vrot.lane.b32.xlu0 %v1929, 32
    %v1938 = vpop.permute.xlu0 %1937
    %s1940 = scalar_lea.vmem [#allocation10], 2
    %1941 = vst.msk [vmem:[%s1940] sm:$0x3] %vm88, %v1938
    %1943 = vrot.lane.b32.xlu0 %v1923, 96
    %v1944 = vpop.permute.xlu0 %1943
    %s1946 = scalar_lea.vmem [#allocation11], 2
    %1947 = vst.msk [vmem:[%s1946] sm:$0x3] %vm88, %v1944
    %v1948 = vld [vmem:[%s7] sm:$0xff]
    %v1949 = vld [vmem:[%s7 + $0x8] sm:$0xff]
    %v1950 = vld [vmem:[%s7 + $0x10] sm:$0xff]
    %v1951 = vld [vmem:[%s7 + $0x18] sm:$0xff]
    %v1952 = vld [vmem:[#allocation4] sm:$0x1]
    %v1954 = vlaneseq
    %v1955 = vshrl.u32 %v1954, 7
    %v1956 = vsub.s32 0, %v1955
    %v1957 = vrot.slane %v1952, %v1956
    %vm1959 = vcmask 261120
    %v1960 = vsel %vm1959, %v1938, 0
    %1962 = vmatprep.subr.mxu0 0.0
    %1963 = vmatpush1.msra.mxu0 %v1948
    %1964 = vmatprep.subr.mxu0 0.0
    %1965 = vmatpush1.msra.mxu0 %v1949
    %1966 = vmatprep.subr.mxu0 0.0
    %1967 = vmatpush1.msra.mxu0 %v1950
    %1968 = vmatprep.subr.mxu0 0.0
    %1969 = vmatpush1.msra.mxu0 %v1951
    %1970 = vmatprep.subr.mxu0 0.0
    %1971 = vmatpush1.msra.mxu0 0.0
    %1972 = vmatprep.subr.mxu0 0.0
    %1973 = vmatpush1.msra.mxu0 0.0
    %1974 = vmatprep.subr.mxu0 0.0
    %1975 = vmatpush1.msra.mxu0 0.0
    %1976 = vmatprep.subr.mxu0 0.0
    %1977 = vmatpush1.msra.mxu0 0.0
    %1978 = vmatprep.subr.mxu0 0.0
    %1979 = vmatpush1.msra.mxu0 0.0
    %1980 = vmatprep.subr.mxu0 0.0
    %1981 = vmatpush1.msra.mxu0 0.0
    %1982 = vmatprep.subr.mxu0 0.0
    %1983 = vmatpush1.msra.mxu0 0.0
    %1984 = vmatprep.subr.mxu0 0.0
    %1985 = vmatpush1.msra.mxu0 0.0
    %1986 = vmatprep.subr.mxu0 0.0
    %1987 = vmatpush1.msra.mxu0 0.0
    %1988 = vmatprep.subr.mxu0 0.0
    %1989 = vmatpush1.msra.mxu0 0.0
    %1990 = vmatprep.subr.mxu0 0.0
    %1991 = vmatpush1.msra.mxu0 0.0
    %1992 = vmatprep.subr.mxu0 0.0
    %1993 = vmatpush1.msra.mxu0 0.0
    %1994 = vmatprep.subr.mxu0 0.0
    %1995 = vmatpush1.msra.mxu0 0.0
    %1996 = vmatprep.subr.mxu0 0.0
    %1997 = vmatpush1.msra.mxu0 0.0
    %1998 = vmatprep.subr.mxu0 0.0
    %1999 = vmatpush1.msra.mxu0 0.0
    %2000 = vmatprep.subr.mxu0 0.0
    %2001 = vmatpush1.msra.mxu0 0.0
    %2002 = vmatprep.subr.mxu0 0.0
    %2003 = vmatpush1.msra.mxu0 0.0
    %2004 = vmatprep.subr.mxu0 0.0
    %2005 = vmatpush1.msra.mxu0 0.0
    %2006 = vmatprep.subr.mxu0 0.0
    %2007 = vmatpush1.msra.mxu0 0.0
    %2008 = vmatprep.subr.mxu0 0.0
    %2009 = vmatpush1.msra.mxu0 0.0
    %2010 = vmatprep.subr.mxu0 0.0
    %2011 = vmatpush1.msra.mxu0 0.0
    %2012 = vmatprep.subr.mxu0 0.0
    %2013 = vmatpush1.msra.mxu0 0.0
    %2014 = vmatprep.subr.mxu0 0.0
    %2015 = vmatpush1.msra.mxu0 0.0
    %2016 = vmatprep.subr.mxu0 0.0
    %2017 = vmatpush1.msra.mxu0 0.0
    %2018 = vmatprep.subr.mxu0 0.0
    %2019 = vmatpush1.msra.mxu0 0.0
    %2020 = vmatprep.subr.mxu0 0.0
    %2021 = vmatpush1.msra.mxu0 0.0
    %2022 = vmatprep.subr.mxu0 0.0
    %2023 = vmatpush1.msra.mxu0 0.0
    %2024 = vmatprep.subr.mxu0 0.0
    %2025 = vmatpush1.msra.mxu0 0.0
    %2026 = vmatprep.mubr.f32.mxu0 0.0
    %2027 = vmatmul.mubr.f32.gmra.mrb[0].mxu0 %v1960
    %v2028 = vpop.f32.mrb[0].mxu0
    %v2029 = vadd.f32 %v1957, %v2028
    %v2030 = vpop.f32.mrb[0].mxu0
    %2031 = vdwg.mxu0
    %v2032 = vxor.u32 %v2029, 2147483648
    %v2033 = vmul.f32 %v2032, 1.442695
    %v2034 = vpow.pop %v2033
    %v2035 = vadd.f32 %v2034, 1.0
    %v2036 = vrcp.pop %v2035
    %v2037 = vmul.f32 1.0, %v2036
    %vm2038 = vcmask 1024
    %2039 = vst.msk [vmem:[%s9] sm:$0x3] %vm2038, %v2037
    // Predicated region
    $region46: #{tpu_custom_call.1} parent=1 // pred_check
      _
    $region47: #{tpu_custom_call.1} parent=1 // pred_check_branch
      %2041 = sbr.rel (0) target = $region49
    $region48: #{tpu_custom_call.1} parent=1 // pred_region
      _
    $region49: #{tpu_custom_call.1} parent=1 // pred_fallthru
      _
    // Predicated region
    $region50: #{tpu_custom_call.1} parent=1 // pred_check
      _
    $region51: #{tpu_custom_call.1} parent=1 // pred_check_branch
      %2043 = sbr.rel (0) target = $region53
    $region52: #{tpu_custom_call.1} parent=1 // pred_region
      %s2045 = ssub.s32 64, 64
      %2046 = vsyncadd [#allocation7], %s2045
      %s2047 = sshll.u32 [#allocation10], 4
      %s2048 = int_to_ptr.vmem [resolvable:$true] %s2047
      %2053 = dma.vmem_to_hbm [thread:$0]  %s2048, 64, %s10, [#allocation7], 32, 32, 2
    $region53: #{tpu_custom_call.1} parent=1 // pred_fallthru
      _
    // Predicated region
    $region54: #{tpu_custom_call.1} parent=1 // pred_check
      _
    $region55: #{tpu_custom_call.1} parent=1 // pred_check_branch
      %2055 = sbr.rel (0) target = $region57
    $region56: #{tpu_custom_call.1} parent=1 // pred_region
      %s2057 = ssub.s32 64, 64
      %2058 = vsyncadd [#allocation12], %s2057
      %s2059 = sshll.u32 [#allocation11], 4
      %s2060 = int_to_ptr.vmem [resolvable:$true] %s2059
      %2065 = dma.vmem_to_hbm [thread:$0]  %s2060, 64, %s11, [#allocation12], 32, 32, 2
    $region57: #{tpu_custom_call.1} parent=1 // pred_fallthru
      _
    // Predicated region
    $region58: #{tpu_custom_call.1} parent=1 // pred_check
      _
    $region59: #{tpu_custom_call.1} parent=1 // pred_check_branch
      %2067 = sbr.rel (0) target = $region61
    $region60: #{tpu_custom_call.1} parent=1 // pred_region
      _
    $region61: #{tpu_custom_call.1} parent=1 // pred_fallthru
      _
    // Predicated region
    $region62: #{tpu_custom_call.1} parent=1 // pred_check
      _
    $region63: #{tpu_custom_call.1} parent=1 // pred_check_branch
      %2069 = sbr.rel (0) target = $region65
    $region64: #{tpu_custom_call.1} parent=1 // pred_region
      %2070 = dma.done [#allocation7], 64
    $region65: #{tpu_custom_call.1} parent=1 // pred_fallthru
      _
    // Predicated region
    $region66: #{tpu_custom_call.1} parent=1 // pred_check
      _
    $region67: #{tpu_custom_call.1} parent=1 // pred_check_branch
      %2072 = sbr.rel (0) target = $region69
    $region68: #{tpu_custom_call.1} parent=1 // pred_region
      %2073 = dma.done [#allocation12], 64
    $region69: #{tpu_custom_call.1} parent=1 // pred_fallthru
      _
    %2074 = vsyncpa [#allocation6], 1
    %2075 = vsyncpa [#allocation9], 1
    %2076 = vsyncpa [#allocation7], 1
    %2077 = vsyncpa [#allocation12], 1

</llo_original>
